<compile_context>
chip_gen: v5e
topology: v5e:2x2
jax: 0.10.0
libtpu: 0.0.40
codegen_flags: <defaults>
</compile_context>

<pallas_src>
import functools

import jax
import jax.numpy as jnp
from jax import lax
from jax.experimental import pallas as pl
from jax.experimental.pallas import tpu as pltpu


# ------------------------------ fused kernel ------------------------------- #

def _rdb_fused_kernel(x_ref, mask_ref,
                      w1_ref, b1_ref, w2_ref, b2_ref, w3_ref, b3_ref,
                      w4_ref, b4_ref, w5_ref, b5_ref,
                      o_ref, feat_ref, ypad_ref, *, img_w, pad):
    # x_ref   : (1, C0, HW)        input image, channels-first, spatial on lanes
    # mask_ref: (2, HW)            column-validity masks for dx = -1 / dx = +1
    # w*_ref  : (9*Cout, Cin)      tap-major weight matrices
    # b*_ref  : (Cout, 1)          biases
    # o_ref   : (1, C0, HW)        output block
    # feat_ref: (C_total, HW)      dense feature scratch [x | x1 | x2 | x3 | x4]
    # ypad_ref: (9*G_max, HW+2*pad) zero-banded staging buffer for the taps
    hw = x_ref.shape[2]
    c0 = x_ref.shape[1]
    feat_dtype = feat_ref.dtype
    n_rows = ypad_ref.shape[0]

    # Zero the left/right halo bands of the staging buffer: together with the
    # column masks they implement the conv's zero padding.  Re-done every grid
    # step so correctness never depends on which core ran step 0.
    zeros_band = jnp.zeros((n_rows, pad), jnp.float32)
    ypad_ref[:, 0:pad] = zeros_band
    ypad_ref[:, pad + hw:pad + hw + pad] = zeros_band

    # Base features (also the residual input) go into the dense scratch.
    feat_ref[0:c0, :] = x_ref[0]

    mask_left = mask_ref[0:1, :]    # valid lanes for dx = -1 taps
    mask_right = mask_ref[1:2, :]   # valid lanes for dx = +1 taps

    def conv3x3(w_ref, b_ref, cin):
        cout = b_ref.shape[0]
        xin = feat_ref[0:cin, :]                                    # (cin, HW)
        # One MXU matmul covering all 9 taps: (9*cout, cin) @ (cin, HW).
        y9 = jnp.dot(w_ref[...], xin, preferred_element_type=jnp.float32)
        ypad_ref[0:9 * cout, pad:pad + hw] = y9                     # aligned store
        acc = jnp.zeros((cout, hw), jnp.float32)
        for t in range(9):                       # static unroll over the taps
            dy = t // 3 - 1
            dx = t % 3 - 1
            start = pad + dy * img_w + dx
            tap = ypad_ref[t * cout:(t + 1) * cout, start:start + hw]
            if dx == -1:
                tap = tap * mask_left
            elif dx == 1:
                tap = tap * mask_right
            acc = acc + tap
        return acc + b_ref[...]                                     # + bias

    # conv1..conv4: LeakyReLU(0.2), then append channels to the dense scratch.
    offset = c0
    cin = c0
    for w_ref, b_ref in ((w1_ref, b1_ref), (w2_ref, b2_ref),
                         (w3_ref, b3_ref), (w4_ref, b4_ref)):
        cout = b_ref.shape[0]
        act = conv3x3(w_ref, b_ref, cin)
        act = jnp.where(act >= 0.0, act, 0.2 * act)
        feat_ref[offset:offset + cout, :] = act.astype(feat_dtype)
        offset += cout
        cin += cout

    # conv5 (no activation) + residual scaling, written straight out.
    x5 = conv3x3(w5_ref, b5_ref, cin)
    out = x5 * 0.2 + x_ref[0].astype(jnp.float32)
    o_ref[0] = out.astype(o_ref.dtype)


# --------------------------------- wrapper --------------------------------- #

def _prep_weight(w):
    """(3, 3, Cin, Cout) HWIO -> (9*Cout, Cin) tap-major weight matrix."""
    kh, kw, cin, cout = w.shape
    return jnp.transpose(w, (0, 1, 3, 2)).reshape(kh * kw * cout, cin)


def residual_dense_block(x_nchw, params):
    """Forward pass.  x_nchw: (N, num_feat, H, W) -> (N, num_feat, H, W)."""
    n, c0, h, w = x_nchw.shape
    hw = h * w
    x_flat = x_nchw.reshape(n, c0, hw)             # free reshape, stays NCHW

    w_mats, b_mats, couts = [], [], []
    for i in range(1, 6):
        wi = params[f"w{i}"]
        w_mats.append(_prep_weight(wi))
        b_mats.append(params[f"b{i}"].reshape(-1, 1))
        couts.append(wi.shape[-1])
    grow = couts[0]
    c_total = c0 + 4 * grow
    g_max = max(couts)

    # Column-validity masks for the dx = -1 / dx = +1 taps (W boundary of the
    # flattened H*W axis); H boundaries fall into the zero bands of the
    # staging scratch inside the kernel.
    col = jnp.arange(hw, dtype=jnp.int32) % w
    masks = jnp.stack([(col != 0).astype(jnp.float32),
                       (col != w - 1).astype(jnp.float32)], axis=0)   # (2, HW)

    pad = pl.cdiv(w + 1, 128) * 128     # lane-aligned halo width (>= W+1)

    kernel = functools.partial(_rdb_fused_kernel, img_w=w, pad=pad)

    in_specs = [
        pl.BlockSpec((1, c0, hw), lambda i: (i, 0, 0)),
        pl.BlockSpec((2, hw), lambda i: (0, 0)),
    ]
    args = [x_flat, masks]
    for wm, bm in zip(w_mats, b_mats):
        in_specs.append(pl.BlockSpec(wm.shape, lambda i: (0, 0)))
        in_specs.append(pl.BlockSpec(bm.shape, lambda i: (0, 0)))
        args.append(wm)
        args.append(bm)

    out_flat = pl.pallas_call(
        kernel,
        out_shape=jax.ShapeDtypeStruct((n, c0, hw), x_nchw.dtype),
        grid=(n,),
        in_specs=in_specs,
        out_specs=pl.BlockSpec((1, c0, hw), lambda i: (i, 0, 0)),
        scratch_shapes=[
            pltpu.VMEM((c_total, hw), x_nchw.dtype),              # dense feats
            pltpu.VMEM((9 * g_max, hw + 2 * pad), jnp.float32),   # tap staging
        ],
        compiler_params=pltpu.CompilerParams(
            dimension_semantics=("parallel",)),
    )(*args)
    return out_flat.reshape(n, c0, h, w)


# --------------------------------- params ---------------------------------- #

def init_rdb_params(key, num_feat, num_grow_ch, dtype=jnp.float32):
    """Deterministic kaiming-normal init * 0.1 (matches default_init_weights)."""
    cins = [num_feat + i * num_grow_ch for i in range(5)]
    couts = [num_grow_ch] * 4 + [num_feat]
    params = {}
    keys = jax.random.split(key, 5)
    for i, (cin, cout, k) in enumerate(zip(cins, couts, keys), start=1):
        fan_in = 9 * cin
        std = (2.0 / fan_in) ** 0.5        # kaiming_normal_, a=0, fan_in
        wgt = std * jax.random.normal(k, (3, 3, cin, cout), dtype=dtype)
        params[f"w{i}"] = 0.1 * wgt        # scale=0.1
        params[f"b{i}"] = jnp.zeros((cout,), dtype=dtype)  # bias_fill=0
    return params


# ------------------------------ pure-JAX ref -------------------------------- #

def _conv3x3_ref(x_nhwc, w, b, apply_lrelu):
    y = lax.conv_general_dilated(
        x_nhwc, w, window_strides=(1, 1), padding="SAME",
        dimension_numbers=("NHWC", "HWIO", "NHWC"))
    y = y + b[None, None, None, :]
    if apply_lrelu:
        y = jnp.where(y >= 0.0, y, 0.2 * y)
    return y


def residual_dense_block_ref(x_nchw, params):
    x = jnp.transpose(x_nchw, (0, 2, 3, 1))
    x1 = _conv3x3_ref(x, params["w1"], params["b1"], True)
    x2 = _conv3x3_ref(jnp.concatenate([x, x1], -1), params["w2"], params["b2"], True)
    x3 = _conv3x3_ref(jnp.concatenate([x, x1, x2], -1), params["w3"], params["b3"], True)
    x4 = _conv3x3_ref(jnp.concatenate([x, x1, x2, x3], -1), params["w4"], params["b4"], True)
    x5 = _conv3x3_ref(jnp.concatenate([x, x1, x2, x3, x4], -1), params["w5"], params["b5"], False)
    return jnp.transpose(x5 * 0.2 + x, (0, 3, 1, 2))


# ----------------------------------- main ----------------------------------- #

if __name__ == "__main__":
    key = jax.random.PRNGKey(0)
    k_x, k_p = jax.random.split(key)

    N, num_feat, num_grow_ch, H, W = 2, 8, 8, 16, 16
    x = jax.random.normal(k_x, (N, num_feat, H, W), dtype=jnp.float32)
    params = init_rdb_params(k_p, num_feat, num_grow_ch)

    out = jax.jit(residual_dense_block)(x, params)
    out = jax.block_until_ready(out)

    ref = residual_dense_block_ref(x, params)
    assert out.shape == x.shape and out.dtype == x.dtype
    assert jnp.allclose(out, ref, atol=2e-4, rtol=2e-4), "mismatch vs JAX reference"

    print("KERNEL_OK")
</pallas_src>

<mosaic_0001>
module attributes {stable_mosaic.version = 11 : i64} {
  func.func @_rdb_fused_kernel(%arg0: i32, %arg1: memref<1x8x256xf32, #tpu.memory_space<vmem>>, %arg2: memref<2x256xf32, #tpu.memory_space<vmem>>, %arg3: memref<72x8xf32, #tpu.memory_space<vmem>>, %arg4: memref<8x1xf32, #tpu.memory_space<vmem>>, %arg5: memref<72x16xf32, #tpu.memory_space<vmem>>, %arg6: memref<8x1xf32, #tpu.memory_space<vmem>>, %arg7: memref<72x24xf32, #tpu.memory_space<vmem>>, %arg8: memref<8x1xf32, #tpu.memory_space<vmem>>, %arg9: memref<72x32xf32, #tpu.memory_space<vmem>>, %arg10: memref<8x1xf32, #tpu.memory_space<vmem>>, %arg11: memref<72x40xf32, #tpu.memory_space<vmem>>, %arg12: memref<8x1xf32, #tpu.memory_space<vmem>>, %arg13: memref<1x8x256xf32, #tpu.memory_space<vmem>>, %arg14: memref<40x256xf32, #tpu.memory_space<vmem>>, %arg15: memref<72x512xf32, #tpu.memory_space<vmem>>) attributes {dimension_semantics = [#tpu.dimension_semantics<parallel>], iteration_bounds = array<i64: 2>, scalar_prefetch = 0 : i64, scratch_operands = 2 : i64, tpu.core_type = #tpu.core_type<tc>, window_params = [{transform_indices = @transform_0, window_bounds = array<i64: 1, 8, 256>}, {pipeline_mode = #tpu.pipeline_mode<synchronous>, transform_indices = @transform_1, window_bounds = array<i64: 2, 256>}, {pipeline_mode = #tpu.pipeline_mode<synchronous>, transform_indices = @transform_2, window_bounds = array<i64: 72, 8>}, {pipeline_mode = #tpu.pipeline_mode<synchronous>, transform_indices = @transform_3, window_bounds = array<i64: 8, 1>}, {pipeline_mode = #tpu.pipeline_mode<synchronous>, transform_indices = @transform_4, window_bounds = array<i64: 72, 16>}, {pipeline_mode = #tpu.pipeline_mode<synchronous>, transform_indices = @transform_5, window_bounds = array<i64: 8, 1>}, {pipeline_mode = #tpu.pipeline_mode<synchronous>, transform_indices = @transform_6, window_bounds = array<i64: 72, 24>}, {pipeline_mode = #tpu.pipeline_mode<synchronous>, transform_indices = @transform_7, window_bounds = array<i64: 8, 1>}, {pipeline_mode = #tpu.pipeline_mode<synchronous>, transform_indices = @transform_8, window_bounds = array<i64: 72, 32>}, {pipeline_mode = #tpu.pipeline_mode<synchronous>, transform_indices = @transform_9, window_bounds = array<i64: 8, 1>}, {pipeline_mode = #tpu.pipeline_mode<synchronous>, transform_indices = @transform_10, window_bounds = array<i64: 72, 40>}, {pipeline_mode = #tpu.pipeline_mode<synchronous>, transform_indices = @transform_11, window_bounds = array<i64: 8, 1>}, {transform_indices = @transform_12, window_bounds = array<i64: 1, 8, 256>}]} {
    %cst = arith.constant 0.000000e+00 : f32
    %0 = vector.broadcast %cst : f32 to vector<72x128xf32>
    %c0 = arith.constant 0 : index
    %c0_0 = arith.constant 0 : index
    %1 = vector.load %arg15[%c0, %c0_0] : memref<72x512xf32, #tpu.memory_space<vmem>>, vector<72x128xf32>
    tpu.vector_store %arg15[%c0, %c0_0], %0 {strides = array<i32>} : memref<72x512xf32, #tpu.memory_space<vmem>>, vector<72x128xf32>,
    %c0_1 = arith.constant 0 : index
    %c384 = arith.constant 384 : index
    %2 = vector.load %arg15[%c0_1, %c384] : memref<72x512xf32, #tpu.memory_space<vmem>>, vector<72x128xf32>
    tpu.vector_store %arg15[%c0_1, %c384], %0 {strides = array<i32>} : memref<72x512xf32, #tpu.memory_space<vmem>>, vector<72x128xf32>,
    %c0_2 = arith.constant 0 : index
    %c0_3 = arith.constant 0 : index
    %c0_4 = arith.constant 0 : index
    %3 = vector.load %arg1[%c0_2, %c0_3, %c0_4] : memref<1x8x256xf32, #tpu.memory_space<vmem>>, vector<1x8x256xf32>
    %4 = vector.shape_cast %3 : vector<1x8x256xf32> to vector<8x256xf32>
    %c0_5 = arith.constant 0 : index
    %c0_6 = arith.constant 0 : index
    %5 = vector.load %arg14[%c0_5, %c0_6] : memref<40x256xf32, #tpu.memory_space<vmem>>, vector<8x256xf32>
    tpu.vector_store %arg14[%c0_5, %c0_6], %4 {strides = array<i32>} : memref<40x256xf32, #tpu.memory_space<vmem>>, vector<8x256xf32>,
    %c0_7 = arith.constant 0 : index
    %c0_8 = arith.constant 0 : index
    %6 = vector.load %arg2[%c0_7, %c0_8] : memref<2x256xf32, #tpu.memory_space<vmem>>, vector<1x256xf32>
    %c1 = arith.constant 1 : index
    %c0_9 = arith.constant 0 : index
    %7 = vector.load %arg2[%c1, %c0_9] : memref<2x256xf32, #tpu.memory_space<vmem>>, vector<1x256xf32>
    %c0_10 = arith.constant 0 : index
    %c0_11 = arith.constant 0 : index
    %8 = vector.load %arg14[%c0_10, %c0_11] : memref<40x256xf32, #tpu.memory_space<vmem>>, vector<8x256xf32>
    %c0_12 = arith.constant 0 : index
    %c0_13 = arith.constant 0 : index
    %9 = vector.load %arg3[%c0_12, %c0_13] : memref<72x8xf32, #tpu.memory_space<vmem>>, vector<72x8xf32>
    %cst_14 = arith.constant dense<0.000000e+00> : vector<72x256xf32>
    %10 = tpu.matmul %9, %8, %cst_14 {dimension_numbers = #tpu.dot_dimension_numbers<[1], [0], [0], [1], [0, 0, 1, 1], [], []>} : vector<72x8xf32>, vector<8x256xf32>, vector<72x256xf32> -> vector<72x256xf32>
    %c0_15 = arith.constant 0 : index
    %c128 = arith.constant 128 : index
    %11 = vector.load %arg15[%c0_15, %c128] : memref<72x512xf32, #tpu.memory_space<vmem>>, vector<72x256xf32>
    tpu.vector_store %arg15[%c0_15, %c128], %10 {strides = array<i32>} : memref<72x512xf32, #tpu.memory_space<vmem>>, vector<72x256xf32>,
    %cst_16 = arith.constant 0.000000e+00 : f32
    %12 = vector.broadcast %cst_16 : f32 to vector<8x256xf32>
    %c0_17 = arith.constant 0 : index
    %c111 = arith.constant 111 : index
    %13 = vector.load %arg15[%c0_17, %c111] : memref<72x512xf32, #tpu.memory_space<vmem>>, vector<8x256xf32>
    %14 = vector.broadcast %6 : vector<1x256xf32> to vector<8x256xf32>
    %15 = arith.mulf %13, %14 : vector<8x256xf32>
    %16 = arith.addf %12, %15 : vector<8x256xf32>
    %c8 = arith.constant 8 : index
    %c112 = arith.constant 112 : index
    %17 = vector.load %arg15[%c8, %c112] : memref<72x512xf32, #tpu.memory_space<vmem>>, vector<8x256xf32>
    %18 = arith.addf %16, %17 : vector<8x256xf32>
    %c16 = arith.constant 16 : index
    %c113 = arith.constant 113 : index
    %19 = vector.load %arg15[%c16, %c113] : memref<72x512xf32, #tpu.memory_space<vmem>>, vector<8x256xf32>
    %20 = vector.broadcast %7 : vector<1x256xf32> to vector<8x256xf32>
    %21 = arith.mulf %19, %20 : vector<8x256xf32>
    %22 = arith.addf %18, %21 : vector<8x256xf32>
    %c24 = arith.constant 24 : index
    %c127 = arith.constant 127 : index
    %23 = vector.load %arg15[%c24, %c127] : memref<72x512xf32, #tpu.memory_space<vmem>>, vector<8x256xf32>
    %24 = vector.broadcast %6 : vector<1x256xf32> to vector<8x256xf32>
    %25 = arith.mulf %23, %24 : vector<8x256xf32>
    %26 = arith.addf %22, %25 : vector<8x256xf32>
    %c32 = arith.constant 32 : index
    %c128_18 = arith.constant 128 : index
    %27 = vector.load %arg15[%c32, %c128_18] : memref<72x512xf32, #tpu.memory_space<vmem>>, vector<8x256xf32>
    %28 = arith.addf %26, %27 : vector<8x256xf32>
    %c40 = arith.constant 40 : index
    %c129 = arith.constant 129 : index
    %29 = vector.load %arg15[%c40, %c129] : memref<72x512xf32, #tpu.memory_space<vmem>>, vector<8x256xf32>
    %30 = vector.broadcast %7 : vector<1x256xf32> to vector<8x256xf32>
    %31 = arith.mulf %29, %30 : vector<8x256xf32>
    %32 = arith.addf %28, %31 : vector<8x256xf32>
    %c48 = arith.constant 48 : index
    %c143 = arith.constant 143 : index
    %33 = vector.load %arg15[%c48, %c143] : memref<72x512xf32, #tpu.memory_space<vmem>>, vector<8x256xf32>
    %34 = vector.broadcast %6 : vector<1x256xf32> to vector<8x256xf32>
    %35 = arith.mulf %33, %34 : vector<8x256xf32>
    %36 = arith.addf %32, %35 : vector<8x256xf32>
    %c56 = arith.constant 56 : index
    %c144 = arith.constant 144 : index
    %37 = vector.load %arg15[%c56, %c144] : memref<72x512xf32, #tpu.memory_space<vmem>>, vector<8x256xf32>
    %38 = arith.addf %36, %37 : vector<8x256xf32>
    %c64 = arith.constant 64 : index
    %c145 = arith.constant 145 : index
    %39 = vector.load %arg15[%c64, %c145] : memref<72x512xf32, #tpu.memory_space<vmem>>, vector<8x256xf32>
    %40 = vector.broadcast %7 : vector<1x256xf32> to vector<8x256xf32>
    %41 = arith.mulf %39, %40 : vector<8x256xf32>
    %42 = arith.addf %38, %41 : vector<8x256xf32>
    %c0_19 = arith.constant 0 : index
    %c0_20 = arith.constant 0 : index
    %43 = vector.load %arg4[%c0_19, %c0_20] : memref<8x1xf32, #tpu.memory_space<vmem>>, vector<8x1xf32>
    %44 = vector.broadcast %43 : vector<8x1xf32> to vector<8x256xf32>
    %45 = arith.addf %42, %44 : vector<8x256xf32>
    %cst_21 = arith.constant 0.000000e+00 : f32
    %46 = vector.broadcast %cst_21 : f32 to vector<8x256xf32>
    %47 = arith.cmpf oge, %45, %46 : vector<8x256xf32>
    %cst_22 = arith.constant 2.000000e-01 : f32
    %48 = vector.broadcast %cst_22 : f32 to vector<8x256xf32>
    %49 = arith.mulf %48, %45 : vector<8x256xf32>
    %50 = arith.select %47, %45, %49 : vector<8x256xi1>, vector<8x256xf32>
    %c8_23 = arith.constant 8 : index
    %c0_24 = arith.constant 0 : index
    %51 = vector.load %arg14[%c8_23, %c0_24] : memref<40x256xf32, #tpu.memory_space<vmem>>, vector<8x256xf32>
    tpu.vector_store %arg14[%c8_23, %c0_24], %50 {strides = array<i32>} : memref<40x256xf32, #tpu.memory_space<vmem>>, vector<8x256xf32>,
    %c0_25 = arith.constant 0 : index
    %c0_26 = arith.constant 0 : index
    %52 = vector.load %arg14[%c0_25, %c0_26] : memref<40x256xf32, #tpu.memory_space<vmem>>, vector<16x256xf32>
    %c0_27 = arith.constant 0 : index
    %c0_28 = arith.constant 0 : index
    %53 = vector.load %arg5[%c0_27, %c0_28] : memref<72x16xf32, #tpu.memory_space<vmem>>, vector<72x16xf32>
    %cst_29 = arith.constant dense<0.000000e+00> : vector<72x256xf32>
    %54 = tpu.matmul %53, %52, %cst_29 {dimension_numbers = #tpu.dot_dimension_numbers<[1], [0], [0], [1], [0, 0, 1, 1], [], []>} : vector<72x16xf32>, vector<16x256xf32>, vector<72x256xf32> -> vector<72x256xf32>
    %c0_30 = arith.constant 0 : index
    %c128_31 = arith.constant 128 : index
    %55 = vector.load %arg15[%c0_30, %c128_31] : memref<72x512xf32, #tpu.memory_space<vmem>>, vector<72x256xf32>
    tpu.vector_store %arg15[%c0_30, %c128_31], %54 {strides = array<i32>} : memref<72x512xf32, #tpu.memory_space<vmem>>, vector<72x256xf32>,
    %cst_32 = arith.constant 0.000000e+00 : f32
    %56 = vector.broadcast %cst_32 : f32 to vector<8x256xf32>
    %c0_33 = arith.constant 0 : index
    %c111_34 = arith.constant 111 : index
    %57 = vector.load %arg15[%c0_33, %c111_34] : memref<72x512xf32, #tpu.memory_space<vmem>>, vector<8x256xf32>
    %58 = vector.broadcast %6 : vector<1x256xf32> to vector<8x256xf32>
    %59 = arith.mulf %57, %58 : vector<8x256xf32>
    %60 = arith.addf %56, %59 : vector<8x256xf32>
    %c8_35 = arith.constant 8 : index
    %c112_36 = arith.constant 112 : index
    %61 = vector.load %arg15[%c8_35, %c112_36] : memref<72x512xf32, #tpu.memory_space<vmem>>, vector<8x256xf32>
    %62 = arith.addf %60, %61 : vector<8x256xf32>
    %c16_37 = arith.constant 16 : index
    %c113_38 = arith.constant 113 : index
    %63 = vector.load %arg15[%c16_37, %c113_38] : memref<72x512xf32, #tpu.memory_space<vmem>>, vector<8x256xf32>
    %64 = vector.broadcast %7 : vector<1x256xf32> to vector<8x256xf32>
    %65 = arith.mulf %63, %64 : vector<8x256xf32>
    %66 = arith.addf %62, %65 : vector<8x256xf32>
    %c24_39 = arith.constant 24 : index
    %c127_40 = arith.constant 127 : index
    %67 = vector.load %arg15[%c24_39, %c127_40] : memref<72x512xf32, #tpu.memory_space<vmem>>, vector<8x256xf32>
    %68 = vector.broadcast %6 : vector<1x256xf32> to vector<8x256xf32>
    %69 = arith.mulf %67, %68 : vector<8x256xf32>
    %70 = arith.addf %66, %69 : vector<8x256xf32>
    %c32_41 = arith.constant 32 : index
    %c128_42 = arith.constant 128 : index
    %71 = vector.load %arg15[%c32_41, %c128_42] : memref<72x512xf32, #tpu.memory_space<vmem>>, vector<8x256xf32>
    %72 = arith.addf %70, %71 : vector<8x256xf32>
    %c40_43 = arith.constant 40 : index
    %c129_44 = arith.constant 129 : index
    %73 = vector.load %arg15[%c40_43, %c129_44] : memref<72x512xf32, #tpu.memory_space<vmem>>, vector<8x256xf32>
    %74 = vector.broadcast %7 : vector<1x256xf32> to vector<8x256xf32>
    %75 = arith.mulf %73, %74 : vector<8x256xf32>
    %76 = arith.addf %72, %75 : vector<8x256xf32>
    %c48_45 = arith.constant 48 : index
    %c143_46 = arith.constant 143 : index
    %77 = vector.load %arg15[%c48_45, %c143_46] : memref<72x512xf32, #tpu.memory_space<vmem>>, vector<8x256xf32>
    %78 = vector.broadcast %6 : vector<1x256xf32> to vector<8x256xf32>
    %79 = arith.mulf %77, %78 : vector<8x256xf32>
    %80 = arith.addf %76, %79 : vector<8x256xf32>
    %c56_47 = arith.constant 56 : index
    %c144_48 = arith.constant 144 : index
    %81 = vector.load %arg15[%c56_47, %c144_48] : memref<72x512xf32, #tpu.memory_space<vmem>>, vector<8x256xf32>
    %82 = arith.addf %80, %81 : vector<8x256xf32>
    %c64_49 = arith.constant 64 : index
    %c145_50 = arith.constant 145 : index
    %83 = vector.load %arg15[%c64_49, %c145_50] : memref<72x512xf32, #tpu.memory_space<vmem>>, vector<8x256xf32>
    %84 = vector.broadcast %7 : vector<1x256xf32> to vector<8x256xf32>
    %85 = arith.mulf %83, %84 : vector<8x256xf32>
    %86 = arith.addf %82, %85 : vector<8x256xf32>
    %c0_51 = arith.constant 0 : index
    %c0_52 = arith.constant 0 : index
    %87 = vector.load %arg6[%c0_51, %c0_52] : memref<8x1xf32, #tpu.memory_space<vmem>>, vector<8x1xf32>
    %88 = vector.broadcast %87 : vector<8x1xf32> to vector<8x256xf32>
    %89 = arith.addf %86, %88 : vector<8x256xf32>
    %cst_53 = arith.constant 0.000000e+00 : f32
    %90 = vector.broadcast %cst_53 : f32 to vector<8x256xf32>
    %91 = arith.cmpf oge, %89, %90 : vector<8x256xf32>
    %cst_54 = arith.constant 2.000000e-01 : f32
    %92 = vector.broadcast %cst_54 : f32 to vector<8x256xf32>
    %93 = arith.mulf %92, %89 : vector<8x256xf32>
    %94 = arith.select %91, %89, %93 : vector<8x256xi1>, vector<8x256xf32>
    %c16_55 = arith.constant 16 : index
    %c0_56 = arith.constant 0 : index
    %95 = vector.load %arg14[%c16_55, %c0_56] : memref<40x256xf32, #tpu.memory_space<vmem>>, vector<8x256xf32>
    tpu.vector_store %arg14[%c16_55, %c0_56], %94 {strides = array<i32>} : memref<40x256xf32, #tpu.memory_space<vmem>>, vector<8x256xf32>,
    %c0_57 = arith.constant 0 : index
    %c0_58 = arith.constant 0 : index
    %96 = vector.load %arg14[%c0_57, %c0_58] : memref<40x256xf32, #tpu.memory_space<vmem>>, vector<24x256xf32>
    %c0_59 = arith.constant 0 : index
    %c0_60 = arith.constant 0 : index
    %97 = vector.load %arg7[%c0_59, %c0_60] : memref<72x24xf32, #tpu.memory_space<vmem>>, vector<72x24xf32>
    %cst_61 = arith.constant dense<0.000000e+00> : vector<72x256xf32>
    %98 = tpu.matmul %97, %96, %cst_61 {dimension_numbers = #tpu.dot_dimension_numbers<[1], [0], [0], [1], [0, 0, 1, 1], [], []>} : vector<72x24xf32>, vector<24x256xf32>, vector<72x256xf32> -> vector<72x256xf32>
    %c0_62 = arith.constant 0 : index
    %c128_63 = arith.constant 128 : index
    %99 = vector.load %arg15[%c0_62, %c128_63] : memref<72x512xf32, #tpu.memory_space<vmem>>, vector<72x256xf32>
    tpu.vector_store %arg15[%c0_62, %c128_63], %98 {strides = array<i32>} : memref<72x512xf32, #tpu.memory_space<vmem>>, vector<72x256xf32>,
    %cst_64 = arith.constant 0.000000e+00 : f32
    %100 = vector.broadcast %cst_64 : f32 to vector<8x256xf32>
    %c0_65 = arith.constant 0 : index
    %c111_66 = arith.constant 111 : index
    %101 = vector.load %arg15[%c0_65, %c111_66] : memref<72x512xf32, #tpu.memory_space<vmem>>, vector<8x256xf32>
    %102 = vector.broadcast %6 : vector<1x256xf32> to vector<8x256xf32>
    %103 = arith.mulf %101, %102 : vector<8x256xf32>
    %104 = arith.addf %100, %103 : vector<8x256xf32>
    %c8_67 = arith.constant 8 : index
    %c112_68 = arith.constant 112 : index
    %105 = vector.load %arg15[%c8_67, %c112_68] : memref<72x512xf32, #tpu.memory_space<vmem>>, vector<8x256xf32>
    %106 = arith.addf %104, %105 : vector<8x256xf32>
    %c16_69 = arith.constant 16 : index
    %c113_70 = arith.constant 113 : index
    %107 = vector.load %arg15[%c16_69, %c113_70] : memref<72x512xf32, #tpu.memory_space<vmem>>, vector<8x256xf32>
    %108 = vector.broadcast %7 : vector<1x256xf32> to vector<8x256xf32>
    %109 = arith.mulf %107, %108 : vector<8x256xf32>
    %110 = arith.addf %106, %109 : vector<8x256xf32>
    %c24_71 = arith.constant 24 : index
    %c127_72 = arith.constant 127 : index
    %111 = vector.load %arg15[%c24_71, %c127_72] : memref<72x512xf32, #tpu.memory_space<vmem>>, vector<8x256xf32>
    %112 = vector.broadcast %6 : vector<1x256xf32> to vector<8x256xf32>
    %113 = arith.mulf %111, %112 : vector<8x256xf32>
    %114 = arith.addf %110, %113 : vector<8x256xf32>
    %c32_73 = arith.constant 32 : index
    %c128_74 = arith.constant 128 : index
    %115 = vector.load %arg15[%c32_73, %c128_74] : memref<72x512xf32, #tpu.memory_space<vmem>>, vector<8x256xf32>
    %116 = arith.addf %114, %115 : vector<8x256xf32>
    %c40_75 = arith.constant 40 : index
    %c129_76 = arith.constant 129 : index
    %117 = vector.load %arg15[%c40_75, %c129_76] : memref<72x512xf32, #tpu.memory_space<vmem>>, vector<8x256xf32>
    %118 = vector.broadcast %7 : vector<1x256xf32> to vector<8x256xf32>
    %119 = arith.mulf %117, %118 : vector<8x256xf32>
    %120 = arith.addf %116, %119 : vector<8x256xf32>
    %c48_77 = arith.constant 48 : index
    %c143_78 = arith.constant 143 : index
    %121 = vector.load %arg15[%c48_77, %c143_78] : memref<72x512xf32, #tpu.memory_space<vmem>>, vector<8x256xf32>
    %122 = vector.broadcast %6 : vector<1x256xf32> to vector<8x256xf32>
    %123 = arith.mulf %121, %122 : vector<8x256xf32>
    %124 = arith.addf %120, %123 : vector<8x256xf32>
    %c56_79 = arith.constant 56 : index
    %c144_80 = arith.constant 144 : index
    %125 = vector.load %arg15[%c56_79, %c144_80] : memref<72x512xf32, #tpu.memory_space<vmem>>, vector<8x256xf32>
    %126 = arith.addf %124, %125 : vector<8x256xf32>
    %c64_81 = arith.constant 64 : index
    %c145_82 = arith.constant 145 : index
    %127 = vector.load %arg15[%c64_81, %c145_82] : memref<72x512xf32, #tpu.memory_space<vmem>>, vector<8x256xf32>
    %128 = vector.broadcast %7 : vector<1x256xf32> to vector<8x256xf32>
    %129 = arith.mulf %127, %128 : vector<8x256xf32>
    %130 = arith.addf %126, %129 : vector<8x256xf32>
    %c0_83 = arith.constant 0 : index
    %c0_84 = arith.constant 0 : index
    %131 = vector.load %arg8[%c0_83, %c0_84] : memref<8x1xf32, #tpu.memory_space<vmem>>, vector<8x1xf32>
    %132 = vector.broadcast %131 : vector<8x1xf32> to vector<8x256xf32>
    %133 = arith.addf %130, %132 : vector<8x256xf32>
    %cst_85 = arith.constant 0.000000e+00 : f32
    %134 = vector.broadcast %cst_85 : f32 to vector<8x256xf32>
    %135 = arith.cmpf oge, %133, %134 : vector<8x256xf32>
    %cst_86 = arith.constant 2.000000e-01 : f32
    %136 = vector.broadcast %cst_86 : f32 to vector<8x256xf32>
    %137 = arith.mulf %136, %133 : vector<8x256xf32>
    %138 = arith.select %135, %133, %137 : vector<8x256xi1>, vector<8x256xf32>
    %c24_87 = arith.constant 24 : index
    %c0_88 = arith.constant 0 : index
    %139 = vector.load %arg14[%c24_87, %c0_88] : memref<40x256xf32, #tpu.memory_space<vmem>>, vector<8x256xf32>
    tpu.vector_store %arg14[%c24_87, %c0_88], %138 {strides = array<i32>} : memref<40x256xf32, #tpu.memory_space<vmem>>, vector<8x256xf32>,
    %c0_89 = arith.constant 0 : index
    %c0_90 = arith.constant 0 : index
    %140 = vector.load %arg14[%c0_89, %c0_90] : memref<40x256xf32, #tpu.memory_space<vmem>>, vector<32x256xf32>
    %c0_91 = arith.constant 0 : index
    %c0_92 = arith.constant 0 : index
    %141 = vector.load %arg9[%c0_91, %c0_92] : memref<72x32xf32, #tpu.memory_space<vmem>>, vector<72x32xf32>
    %cst_93 = arith.constant dense<0.000000e+00> : vector<72x256xf32>
    %142 = tpu.matmul %141, %140, %cst_93 {dimension_numbers = #tpu.dot_dimension_numbers<[1], [0], [0], [1], [0, 0, 1, 1], [], []>} : vector<72x32xf32>, vector<32x256xf32>, vector<72x256xf32> -> vector<72x256xf32>
    %c0_94 = arith.constant 0 : index
    %c128_95 = arith.constant 128 : index
    %143 = vector.load %arg15[%c0_94, %c128_95] : memref<72x512xf32, #tpu.memory_space<vmem>>, vector<72x256xf32>
    tpu.vector_store %arg15[%c0_94, %c128_95], %142 {strides = array<i32>} : memref<72x512xf32, #tpu.memory_space<vmem>>, vector<72x256xf32>,
    %cst_96 = arith.constant 0.000000e+00 : f32
    %144 = vector.broadcast %cst_96 : f32 to vector<8x256xf32>
    %c0_97 = arith.constant 0 : index
    %c111_98 = arith.constant 111 : index
    %145 = vector.load %arg15[%c0_97, %c111_98] : memref<72x512xf32, #tpu.memory_space<vmem>>, vector<8x256xf32>
    %146 = vector.broadcast %6 : vector<1x256xf32> to vector<8x256xf32>
    %147 = arith.mulf %145, %146 : vector<8x256xf32>
    %148 = arith.addf %144, %147 : vector<8x256xf32>
    %c8_99 = arith.constant 8 : index
    %c112_100 = arith.constant 112 : index
    %149 = vector.load %arg15[%c8_99, %c112_100] : memref<72x512xf32, #tpu.memory_space<vmem>>, vector<8x256xf32>
    %150 = arith.addf %148, %149 : vector<8x256xf32>
    %c16_101 = arith.constant 16 : index
    %c113_102 = arith.constant 113 : index
    %151 = vector.load %arg15[%c16_101, %c113_102] : memref<72x512xf32, #tpu.memory_space<vmem>>, vector<8x256xf32>
    %152 = vector.broadcast %7 : vector<1x256xf32> to vector<8x256xf32>
    %153 = arith.mulf %151, %152 : vector<8x256xf32>
    %154 = arith.addf %150, %153 : vector<8x256xf32>
    %c24_103 = arith.constant 24 : index
    %c127_104 = arith.constant 127 : index
    %155 = vector.load %arg15[%c24_103, %c127_104] : memref<72x512xf32, #tpu.memory_space<vmem>>, vector<8x256xf32>
    %156 = vector.broadcast %6 : vector<1x256xf32> to vector<8x256xf32>
    %157 = arith.mulf %155, %156 : vector<8x256xf32>
    %158 = arith.addf %154, %157 : vector<8x256xf32>
    %c32_105 = arith.constant 32 : index
    %c128_106 = arith.constant 128 : index
    %159 = vector.load %arg15[%c32_105, %c128_106] : memref<72x512xf32, #tpu.memory_space<vmem>>, vector<8x256xf32>
    %160 = arith.addf %158, %159 : vector<8x256xf32>
    %c40_107 = arith.constant 40 : index
    %c129_108 = arith.constant 129 : index
    %161 = vector.load %arg15[%c40_107, %c129_108] : memref<72x512xf32, #tpu.memory_space<vmem>>, vector<8x256xf32>
    %162 = vector.broadcast %7 : vector<1x256xf32> to vector<8x256xf32>
    %163 = arith.mulf %161, %162 : vector<8x256xf32>
    %164 = arith.addf %160, %163 : vector<8x256xf32>
    %c48_109 = arith.constant 48 : index
    %c143_110 = arith.constant 143 : index
    %165 = vector.load %arg15[%c48_109, %c143_110] : memref<72x512xf32, #tpu.memory_space<vmem>>, vector<8x256xf32>
    %166 = vector.broadcast %6 : vector<1x256xf32> to vector<8x256xf32>
    %167 = arith.mulf %165, %166 : vector<8x256xf32>
    %168 = arith.addf %164, %167 : vector<8x256xf32>
    %c56_111 = arith.constant 56 : index
    %c144_112 = arith.constant 144 : index
    %169 = vector.load %arg15[%c56_111, %c144_112] : memref<72x512xf32, #tpu.memory_space<vmem>>, vector<8x256xf32>
    %170 = arith.addf %168, %169 : vector<8x256xf32>
    %c64_113 = arith.constant 64 : index
    %c145_114 = arith.constant 145 : index
    %171 = vector.load %arg15[%c64_113, %c145_114] : memref<72x512xf32, #tpu.memory_space<vmem>>, vector<8x256xf32>
    %172 = vector.broadcast %7 : vector<1x256xf32> to vector<8x256xf32>
    %173 = arith.mulf %171, %172 : vector<8x256xf32>
    %174 = arith.addf %170, %173 : vector<8x256xf32>
    %c0_115 = arith.constant 0 : index
    %c0_116 = arith.constant 0 : index
    %175 = vector.load %arg10[%c0_115, %c0_116] : memref<8x1xf32, #tpu.memory_space<vmem>>, vector<8x1xf32>
    %176 = vector.broadcast %175 : vector<8x1xf32> to vector<8x256xf32>
    %177 = arith.addf %174, %176 : vector<8x256xf32>
    %cst_117 = arith.constant 0.000000e+00 : f32
    %178 = vector.broadcast %cst_117 : f32 to vector<8x256xf32>
    %179 = arith.cmpf oge, %177, %178 : vector<8x256xf32>
    %cst_118 = arith.constant 2.000000e-01 : f32
    %180 = vector.broadcast %cst_118 : f32 to vector<8x256xf32>
    %181 = arith.mulf %180, %177 : vector<8x256xf32>
    %182 = arith.select %179, %177, %181 : vector<8x256xi1>, vector<8x256xf32>
    %c32_119 = arith.constant 32 : index
    %c0_120 = arith.constant 0 : index
    %183 = vector.load %arg14[%c32_119, %c0_120] : memref<40x256xf32, #tpu.memory_space<vmem>>, vector<8x256xf32>
    tpu.vector_store %arg14[%c32_119, %c0_120], %182 {strides = array<i32>} : memref<40x256xf32, #tpu.memory_space<vmem>>, vector<8x256xf32>,
    %c0_121 = arith.constant 0 : index
    %c0_122 = arith.constant 0 : index
    %184 = vector.load %arg14[%c0_121, %c0_122] : memref<40x256xf32, #tpu.memory_space<vmem>>, vector<40x256xf32>
    %c0_123 = arith.constant 0 : index
    %c0_124 = arith.constant 0 : index
    %185 = vector.load %arg11[%c0_123, %c0_124] : memref<72x40xf32, #tpu.memory_space<vmem>>, vector<72x40xf32>
    %cst_125 = arith.constant dense<0.000000e+00> : vector<72x256xf32>
    %186 = tpu.matmul %185, %184, %cst_125 {dimension_numbers = #tpu.dot_dimension_numbers<[1], [0], [0], [1], [0, 0, 1, 1], [], []>} : vector<72x40xf32>, vector<40x256xf32>, vector<72x256xf32> -> vector<72x256xf32>
    %c0_126 = arith.constant 0 : index
    %c128_127 = arith.constant 128 : index
    %187 = vector.load %arg15[%c0_126, %c128_127] : memref<72x512xf32, #tpu.memory_space<vmem>>, vector<72x256xf32>
    tpu.vector_store %arg15[%c0_126, %c128_127], %186 {strides = array<i32>} : memref<72x512xf32, #tpu.memory_space<vmem>>, vector<72x256xf32>,
    %cst_128 = arith.constant 0.000000e+00 : f32
    %188 = vector.broadcast %cst_128 : f32 to vector<8x256xf32>
    %c0_129 = arith.constant 0 : index
    %c111_130 = arith.constant 111 : index
    %189 = vector.load %arg15[%c0_129, %c111_130] : memref<72x512xf32, #tpu.memory_space<vmem>>, vector<8x256xf32>
    %190 = vector.broadcast %6 : vector<1x256xf32> to vector<8x256xf32>
    %191 = arith.mulf %189, %190 : vector<8x256xf32>
    %192 = arith.addf %188, %191 : vector<8x256xf32>
    %c8_131 = arith.constant 8 : index
    %c112_132 = arith.constant 112 : index
    %193 = vector.load %arg15[%c8_131, %c112_132] : memref<72x512xf32, #tpu.memory_space<vmem>>, vector<8x256xf32>
    %194 = arith.addf %192, %193 : vector<8x256xf32>
    %c16_133 = arith.constant 16 : index
    %c113_134 = arith.constant 113 : index
    %195 = vector.load %arg15[%c16_133, %c113_134] : memref<72x512xf32, #tpu.memory_space<vmem>>, vector<8x256xf32>
    %196 = vector.broadcast %7 : vector<1x256xf32> to vector<8x256xf32>
    %197 = arith.mulf %195, %196 : vector<8x256xf32>
    %198 = arith.addf %194, %197 : vector<8x256xf32>
    %c24_135 = arith.constant 24 : index
    %c127_136 = arith.constant 127 : index
    %199 = vector.load %arg15[%c24_135, %c127_136] : memref<72x512xf32, #tpu.memory_space<vmem>>, vector<8x256xf32>
    %200 = vector.broadcast %6 : vector<1x256xf32> to vector<8x256xf32>
    %201 = arith.mulf %199, %200 : vector<8x256xf32>
    %202 = arith.addf %198, %201 : vector<8x256xf32>
    %c32_137 = arith.constant 32 : index
    %c128_138 = arith.constant 128 : index
    %203 = vector.load %arg15[%c32_137, %c128_138] : memref<72x512xf32, #tpu.memory_space<vmem>>, vector<8x256xf32>
    %204 = arith.addf %202, %203 : vector<8x256xf32>
    %c40_139 = arith.constant 40 : index
    %c129_140 = arith.constant 129 : index
    %205 = vector.load %arg15[%c40_139, %c129_140] : memref<72x512xf32, #tpu.memory_space<vmem>>, vector<8x256xf32>
    %206 = vector.broadcast %7 : vector<1x256xf32> to vector<8x256xf32>
    %207 = arith.mulf %205, %206 : vector<8x256xf32>
    %208 = arith.addf %204, %207 : vector<8x256xf32>
    %c48_141 = arith.constant 48 : index
    %c143_142 = arith.constant 143 : index
    %209 = vector.load %arg15[%c48_141, %c143_142] : memref<72x512xf32, #tpu.memory_space<vmem>>, vector<8x256xf32>
    %210 = vector.broadcast %6 : vector<1x256xf32> to vector<8x256xf32>
    %211 = arith.mulf %209, %210 : vector<8x256xf32>
    %212 = arith.addf %208, %211 : vector<8x256xf32>
    %c56_143 = arith.constant 56 : index
    %c144_144 = arith.constant 144 : index
    %213 = vector.load %arg15[%c56_143, %c144_144] : memref<72x512xf32, #tpu.memory_space<vmem>>, vector<8x256xf32>
    %214 = arith.addf %212, %213 : vector<8x256xf32>
    %c64_145 = arith.constant 64 : index
    %c145_146 = arith.constant 145 : index
    %215 = vector.load %arg15[%c64_145, %c145_146] : memref<72x512xf32, #tpu.memory_space<vmem>>, vector<8x256xf32>
    %216 = vector.broadcast %7 : vector<1x256xf32> to vector<8x256xf32>
    %217 = arith.mulf %215, %216 : vector<8x256xf32>
    %218 = arith.addf %214, %217 : vector<8x256xf32>
    %c0_147 = arith.constant 0 : index
    %c0_148 = arith.constant 0 : index
    %219 = vector.load %arg12[%c0_147, %c0_148] : memref<8x1xf32, #tpu.memory_space<vmem>>, vector<8x1xf32>
    %220 = vector.broadcast %219 : vector<8x1xf32> to vector<8x256xf32>
    %221 = arith.addf %218, %220 : vector<8x256xf32>
    %cst_149 = arith.constant 2.000000e-01 : f32
    %222 = vector.broadcast %cst_149 : f32 to vector<8x256xf32>
    %223 = arith.mulf %221, %222 : vector<8x256xf32>
    %c0_150 = arith.constant 0 : index
    %c0_151 = arith.constant 0 : index
    %c0_152 = arith.constant 0 : index
    %224 = vector.load %arg1[%c0_150, %c0_151, %c0_152] : memref<1x8x256xf32, #tpu.memory_space<vmem>>, vector<1x8x256xf32>
    %225 = vector.shape_cast %224 : vector<1x8x256xf32> to vector<8x256xf32>
    %226 = arith.addf %223, %225 : vector<8x256xf32>
    %c0_153 = arith.constant 0 : index
    %c0_154 = arith.constant 0 : index
    %c0_155 = arith.constant 0 : index
    %227 = vector.load %arg13[%c0_153, %c0_154, %c0_155] : memref<1x8x256xf32, #tpu.memory_space<vmem>>, vector<1x8x256xf32>
    %228 = vector.shape_cast %227 : vector<1x8x256xf32> to vector<8x256xf32>
    %229 = vector.shape_cast %226 : vector<8x256xf32> to vector<1x8x256xf32>
    tpu.vector_store %arg13[%c0_153, %c0_154, %c0_155], %229 {strides = array<i32>} : memref<1x8x256xf32, #tpu.memory_space<vmem>>, vector<1x8x256xf32>,
    return
  }
  func.func @transform_0(%arg0: i32) -> (i32, i32, i32) {
    %c0_i32 = arith.constant 0 : i32
    %c0_i32_0 = arith.constant 0 : i32
    %c0_i32_1 = arith.constant 0 : i32
    return %arg0, %c0_i32, %c0_i32_0 : i32, i32, i32
  }
  func.func @transform_1(%arg0: i32) -> (i32, i32) {
    %c0_i32 = arith.constant 0 : i32
    %c0_i32_0 = arith.constant 0 : i32
    %c0_i32_1 = arith.constant 0 : i32
    return %c0_i32, %c0_i32_0 : i32, i32
  }
  func.func @transform_2(%arg0: i32) -> (i32, i32) {
    %c0_i32 = arith.constant 0 : i32
    %c0_i32_0 = arith.constant 0 : i32
    %c0_i32_1 = arith.constant 0 : i32
    return %c0_i32, %c0_i32_0 : i32, i32
  }
  func.func @transform_3(%arg0: i32) -> (i32, i32) {
    %c0_i32 = arith.constant 0 : i32
    %c0_i32_0 = arith.constant 0 : i32
    %c0_i32_1 = arith.constant 0 : i32
    return %c0_i32, %c0_i32_0 : i32, i32
  }
  func.func @transform_4(%arg0: i32) -> (i32, i32) {
    %c0_i32 = arith.constant 0 : i32
    %c0_i32_0 = arith.constant 0 : i32
    %c0_i32_1 = arith.constant 0 : i32
    return %c0_i32, %c0_i32_0 : i32, i32
  }
  func.func @transform_5(%arg0: i32) -> (i32, i32) {
    %c0_i32 = arith.constant 0 : i32
    %c0_i32_0 = arith.constant 0 : i32
    %c0_i32_1 = arith.constant 0 : i32
    return %c0_i32, %c0_i32_0 : i32, i32
  }
  func.func @transform_6(%arg0: i32) -> (i32, i32) {
    %c0_i32 = arith.constant 0 : i32
    %c0_i32_0 = arith.constant 0 : i32
    %c0_i32_1 = arith.constant 0 : i32
    return %c0_i32, %c0_i32_0 : i32, i32
  }
  func.func @transform_7(%arg0: i32) -> (i32, i32) {
    %c0_i32 = arith.constant 0 : i32
    %c0_i32_0 = arith.constant 0 : i32
    %c0_i32_1 = arith.constant 0 : i32
    return %c0_i32, %c0_i32_0 : i32, i32
  }
  func.func @transform_8(%arg0: i32) -> (i32, i32) {
    %c0_i32 = arith.constant 0 : i32
    %c0_i32_0 = arith.constant 0 : i32
    %c0_i32_1 = arith.constant 0 : i32
    return %c0_i32, %c0_i32_0 : i32, i32
  }
  func.func @transform_9(%arg0: i32) -> (i32, i32) {
    %c0_i32 = arith.constant 0 : i32
    %c0_i32_0 = arith.constant 0 : i32
    %c0_i32_1 = arith.constant 0 : i32
    return %c0_i32, %c0_i32_0 : i32, i32
  }
  func.func @transform_10(%arg0: i32) -> (i32, i32) {
    %c0_i32 = arith.constant 0 : i32
    %c0_i32_0 = arith.constant 0 : i32
    %c0_i32_1 = arith.constant 0 : i32
    return %c0_i32, %c0_i32_0 : i32, i32
  }
  func.func @transform_11(%arg0: i32) -> (i32, i32) {
    %c0_i32 = arith.constant 0 : i32
    %c0_i32_0 = arith.constant 0 : i32
    %c0_i32_1 = arith.constant 0 : i32
    return %c0_i32, %c0_i32_0 : i32, i32
  }
  func.func @transform_12(%arg0: i32) -> (i32, i32, i32) {
    %c0_i32 = arith.constant 0 : i32
    %c0_i32_0 = arith.constant 0 : i32
    %c0_i32_1 = arith.constant 0 : i32
    return %arg0, %c0_i32, %c0_i32_0 : i32, i32, i32
  }
}

</mosaic_0001>

<llo_original>
// kernel: residual_dense_block.1
$region0: #{residual_dense_block.1}
  #allocation0 [shape = 'u32[]', space=smem, size = 0x4, offset = 0x4, fixed_abs, tag = 'smem constant byte address 0x4 - core index']
  #allocation1 [shape = 'u32[72,128]{1,0:T(1,128)}', space=vmem, size = 0x9000, scoped, tag = 'internal scratch']
  #allocation2 [shape = 'f32[40,256]{1,0:T(8,128)}', space=vmem, size = 0xa000, scoped, tag = 'scratch operand']
  #allocation3 [shape = 'f32[72,512]{1,0:T(8,128)}', space=vmem, size = 0x24000, scoped, tag = 'scratch operand']
  %s0 = inlined_call_operand.vmem [shape: f32[2,8,256], index: 0, kind: input, shape index: {}]
  %s1 = inlined_call_operand.vmem [shape: f32[2,256], index: 1, kind: input, shape index: {}]
  %s2 = inlined_call_operand.vmem [shape: f32[72,8], index: 2, kind: input, shape index: {}]
  %s3 = inlined_call_operand.vmem [shape: f32[8,1], index: 3, kind: input, shape index: {}]
  %s4 = inlined_call_operand.vmem [shape: f32[72,16], index: 4, kind: input, shape index: {}]
  %s5 = inlined_call_operand.vmem [shape: f32[8,1], index: 5, kind: input, shape index: {}]
  %s6 = inlined_call_operand.vmem [shape: f32[72,24], index: 6, kind: input, shape index: {}]
  %s7 = inlined_call_operand.vmem [shape: f32[8,1], index: 7, kind: input, shape index: {}]
  %s8 = inlined_call_operand.vmem [shape: f32[72,32], index: 8, kind: input, shape index: {}]
  %s9 = inlined_call_operand.vmem [shape: f32[8,1], index: 9, kind: input, shape index: {}]
  %s10 = inlined_call_operand.vmem [shape: f32[72,40], index: 10, kind: input, shape index: {}]
  %s11 = inlined_call_operand.vmem [shape: f32[8,1], index: 11, kind: input, shape index: {}]
  %s12 = inlined_call_operand.vmem [shape: f32[2,8,256], index: 12, kind: output, shape index: {}]
  %s13 = sld [smem:[#allocation0]]
  $region81: #{residual_dense_block.1} parent=0
    _
  %s15 = ssub.s32 1, %s13
  %s16 = scalar_select 0, %s15, %s13
  loop: start=0, step=1, limit=4
  $region2: #{residual_dense_block.1} parent=0 // loop_pre_header
    _
  $region3: #{residual_dense_block.1} parent=0 // loop_header
    %s18 = sphi 0, %s22
    %p19 = scmp.ge.s32.totalorder %s18, 4
    %s28 = sphi 0, %s30
    %s31 = sphi 0, %s28
    %s32 = sphi 0, %s31
    %s48 = sphi 0, %s32
    %s52 = sphi 0, %s52
    %s54 = sphi 0, %s52
    %s55 = sphi 0, %s54
    %s69 = sphi 0, %s55
    %s73 = sphi 0, %s73
    %s75 = sphi 0, %s73
    %s76 = sphi 0, %s75
    %s90 = sphi 0, %s76
    %s94 = sphi 0, %s94
    %s96 = sphi 0, %s94
    %s97 = sphi 0, %s96
    %s111 = sphi 0, %s97
    %s115 = sphi 0, %s115
    %s117 = sphi 0, %s115
    %s118 = sphi 0, %s117
    %s132 = sphi 0, %s118
    %s136 = sphi 0, %s136
    %s138 = sphi 0, %s136
    %s139 = sphi 0, %s138
    %s153 = sphi 0, %s139
    %s157 = sphi 0, %s157
    %s159 = sphi 0, %s157
    %s160 = sphi 0, %s159
    %s174 = sphi 0, %s160
    %s178 = sphi 0, %s178
    %s180 = sphi 0, %s178
    %s181 = sphi 0, %s180
    %s195 = sphi 0, %s181
    %s199 = sphi 0, %s199
    %s201 = sphi 0, %s199
    %s202 = sphi 0, %s201
    %s216 = sphi 0, %s202
    %s220 = sphi 0, %s220
    %s222 = sphi 0, %s220
    %s223 = sphi 0, %s222
    %s237 = sphi 0, %s223
    %s241 = sphi 0, %s241
    %s243 = sphi 0, %s241
    %s244 = sphi 0, %s243
    %s258 = sphi 0, %s244
    %s262 = sphi 0, %s262
    %s264 = sphi 0, %s262
    %s265 = sphi 0, %s264
    %s279 = sphi 0, %s265
    %s285 = sphi 0, %s287
    %s288 = sphi 0, %s285
    %s289 = sphi 0, %s288
    %s305 = sphi 0, %s289
  $region4: #{residual_dense_block.1} parent=0 // loop_header_branch
    %21 = sbr.rel (%p19) target = $region8
  $region5: #{residual_dense_block.1} parent=0 // loop_body
    %s23 = ssub.s32 %s18, 1
    %s24 = ssub.s32 %s18, 2
    %s25 = sadd.s32 %s18, 1
    %s26 = ssub.s32 %s18, %s25
    %p27 = scmp.eq.s32.totalorder %s26, 0
    %s29 = sadd.s32 %s28, 1
    %s30 = scalar_select %p27, %s28, %s29
    %p33 = pneg %p27
    %p34 = scmp.eq.s32.totalorder %s18, 1
    %p35 = por %p33, %p34
    %p36 = scmp.ne.s32.totalorder %s28, %s31
    %p37 = scmp.eq.s32.totalorder %s18, 0
    %p38 = por %p36, %p37
    %p39 = scmp.ne.s32.totalorder %s28, %s31
    %p40 = scmp.eq.s32.totalorder %s23, 1
    %p41 = por %p39, %p40
    %p42 = scmp.ne.s32.totalorder %s31, %s32
    %p43 = scmp.eq.s32.totalorder %s23, 0
    %p44 = por %p42, %p43
    %p45 = scmp.ne.s32.totalorder %s31, %s32
    %p46 = scmp.eq.s32.totalorder %s24, 1
    %p47 = por %p45, %p46
    %p49 = scmp.ne.s32.totalorder %s32, %s48
    %p50 = scmp.eq.s32.totalorder %s24, 0
    %p51 = por %p49, %p50
    %s53 = sadd.s32 %s52, 1
    %p56 = scmp.eq.s32.totalorder %s18, 1
    %p57 = scmp.ne.s32.totalorder %s52, %s54
    %p58 = scmp.eq.s32.totalorder %s18, 0
    %p59 = por %p57, %p58
    %p60 = scmp.ne.s32.totalorder %s52, %s54
    %p61 = scmp.eq.s32.totalorder %s23, 1
    %p62 = por %p60, %p61
    %p63 = scmp.ne.s32.totalorder %s54, %s55
    %p64 = scmp.eq.s32.totalorder %s23, 0
    %p65 = por %p63, %p64
    %p66 = scmp.ne.s32.totalorder %s54, %s55
    %p67 = scmp.eq.s32.totalorder %s24, 1
    %p68 = por %p66, %p67
    %p70 = scmp.ne.s32.totalorder %s55, %s69
    %p71 = scmp.eq.s32.totalorder %s24, 0
    %p72 = por %p70, %p71
    %s74 = sadd.s32 %s73, 1
    %p77 = scmp.eq.s32.totalorder %s18, 1
    %p78 = scmp.ne.s32.totalorder %s73, %s75
    %p79 = scmp.eq.s32.totalorder %s18, 0
    %p80 = por %p78, %p79
    %p81 = scmp.ne.s32.totalorder %s73, %s75
    %p82 = scmp.eq.s32.totalorder %s23, 1
    %p83 = por %p81, %p82
    %p84 = scmp.ne.s32.totalorder %s75, %s76
    %p85 = scmp.eq.s32.totalorder %s23, 0
    %p86 = por %p84, %p85
    %p87 = scmp.ne.s32.totalorder %s75, %s76
    %p88 = scmp.eq.s32.totalorder %s24, 1
    %p89 = por %p87, %p88
    %p91 = scmp.ne.s32.totalorder %s76, %s90
    %p92 = scmp.eq.s32.totalorder %s24, 0
    %p93 = por %p91, %p92
    %s95 = sadd.s32 %s94, 1
    %p98 = scmp.eq.s32.totalorder %s18, 1
    %p99 = scmp.ne.s32.totalorder %s94, %s96
    %p100 = scmp.eq.s32.totalorder %s18, 0
    %p101 = por %p99, %p100
    %p102 = scmp.ne.s32.totalorder %s94, %s96
    %p103 = scmp.eq.s32.totalorder %s23, 1
    %p104 = por %p102, %p103
    %p105 = scmp.ne.s32.totalorder %s96, %s97
    %p106 = scmp.eq.s32.totalorder %s23, 0
    %p107 = por %p105, %p106
    %p108 = scmp.ne.s32.totalorder %s96, %s97
    %p109 = scmp.eq.s32.totalorder %s24, 1
    %p110 = por %p108, %p109
    %p112 = scmp.ne.s32.totalorder %s97, %s111
    %p113 = scmp.eq.s32.totalorder %s24, 0
    %p114 = por %p112, %p113
    %s116 = sadd.s32 %s115, 1
    %p119 = scmp.eq.s32.totalorder %s18, 1
    %p120 = scmp.ne.s32.totalorder %s115, %s117
    %p121 = scmp.eq.s32.totalorder %s18, 0
    %p122 = por %p120, %p121
    %p123 = scmp.ne.s32.totalorder %s115, %s117
    %p124 = scmp.eq.s32.totalorder %s23, 1
    %p125 = por %p123, %p124
    %p126 = scmp.ne.s32.totalorder %s117, %s118
    %p127 = scmp.eq.s32.totalorder %s23, 0
    %p128 = por %p126, %p127
    %p129 = scmp.ne.s32.totalorder %s117, %s118
    %p130 = scmp.eq.s32.totalorder %s24, 1
    %p131 = por %p129, %p130
    %p133 = scmp.ne.s32.totalorder %s118, %s132
    %p134 = scmp.eq.s32.totalorder %s24, 0
    %p135 = por %p133, %p134
    %s137 = sadd.s32 %s136, 1
    %p140 = scmp.eq.s32.totalorder %s18, 1
    %p141 = scmp.ne.s32.totalorder %s136, %s138
    %p142 = scmp.eq.s32.totalorder %s18, 0
    %p143 = por %p141, %p142
    %p144 = scmp.ne.s32.totalorder %s136, %s138
    %p145 = scmp.eq.s32.totalorder %s23, 1
    %p146 = por %p144, %p145
    %p147 = scmp.ne.s32.totalorder %s138, %s139
    %p148 = scmp.eq.s32.totalorder %s23, 0
    %p149 = por %p147, %p148
    %p150 = scmp.ne.s32.totalorder %s138, %s139
    %p151 = scmp.eq.s32.totalorder %s24, 1
    %p152 = por %p150, %p151
    %p154 = scmp.ne.s32.totalorder %s139, %s153
    %p155 = scmp.eq.s32.totalorder %s24, 0
    %p156 = por %p154, %p155
    %s158 = sadd.s32 %s157, 1
    %p161 = scmp.eq.s32.totalorder %s18, 1
    %p162 = scmp.ne.s32.totalorder %s157, %s159
    %p163 = scmp.eq.s32.totalorder %s18, 0
    %p164 = por %p162, %p163
    %p165 = scmp.ne.s32.totalorder %s157, %s159
    %p166 = scmp.eq.s32.totalorder %s23, 1
    %p167 = por %p165, %p166
    %p168 = scmp.ne.s32.totalorder %s159, %s160
    %p169 = scmp.eq.s32.totalorder %s23, 0
    %p170 = por %p168, %p169
    %p171 = scmp.ne.s32.totalorder %s159, %s160
    %p172 = scmp.eq.s32.totalorder %s24, 1
    %p173 = por %p171, %p172
    %p175 = scmp.ne.s32.totalorder %s160, %s174
    %p176 = scmp.eq.s32.totalorder %s24, 0
    %p177 = por %p175, %p176
    %s179 = sadd.s32 %s178, 1
    %p182 = scmp.eq.s32.totalorder %s18, 1
    %p183 = scmp.ne.s32.totalorder %s178, %s180
    %p184 = scmp.eq.s32.totalorder %s18, 0
    %p185 = por %p183, %p184
    %p186 = scmp.ne.s32.totalorder %s178, %s180
    %p187 = scmp.eq.s32.totalorder %s23, 1
    %p188 = por %p186, %p187
    %p189 = scmp.ne.s32.totalorder %s180, %s181
    %p190 = scmp.eq.s32.totalorder %s23, 0
    %p191 = por %p189, %p190
    %p192 = scmp.ne.s32.totalorder %s180, %s181
    %p193 = scmp.eq.s32.totalorder %s24, 1
    %p194 = por %p192, %p193
    %p196 = scmp.ne.s32.totalorder %s181, %s195
    %p197 = scmp.eq.s32.totalorder %s24, 0
    %p198 = por %p196, %p197
    %s200 = sadd.s32 %s199, 1
    %p203 = scmp.eq.s32.totalorder %s18, 1
    %p204 = scmp.ne.s32.totalorder %s199, %s201
    %p205 = scmp.eq.s32.totalorder %s18, 0
    %p206 = por %p204, %p205
    %p207 = scmp.ne.s32.totalorder %s199, %s201
    %p208 = scmp.eq.s32.totalorder %s23, 1
    %p209 = por %p207, %p208
    %p210 = scmp.ne.s32.totalorder %s201, %s202
    %p211 = scmp.eq.s32.totalorder %s23, 0
    %p212 = por %p210, %p211
    %p213 = scmp.ne.s32.totalorder %s201, %s202
    %p214 = scmp.eq.s32.totalorder %s24, 1
    %p215 = por %p213, %p214
    %p217 = scmp.ne.s32.totalorder %s202, %s216
    %p218 = scmp.eq.s32.totalorder %s24, 0
    %p219 = por %p217, %p218
    %s221 = sadd.s32 %s220, 1
    %p224 = scmp.eq.s32.totalorder %s18, 1
    %p225 = scmp.ne.s32.totalorder %s220, %s222
    %p226 = scmp.eq.s32.totalorder %s18, 0
    %p227 = por %p225, %p226
    %p228 = scmp.ne.s32.totalorder %s220, %s222
    %p229 = scmp.eq.s32.totalorder %s23, 1
    %p230 = por %p228, %p229
    %p231 = scmp.ne.s32.totalorder %s222, %s223
    %p232 = scmp.eq.s32.totalorder %s23, 0
    %p233 = por %p231, %p232
    %p234 = scmp.ne.s32.totalorder %s222, %s223
    %p235 = scmp.eq.s32.totalorder %s24, 1
    %p236 = por %p234, %p235
    %p238 = scmp.ne.s32.totalorder %s223, %s237
    %p239 = scmp.eq.s32.totalorder %s24, 0
    %p240 = por %p238, %p239
    %s242 = sadd.s32 %s241, 1
    %p245 = scmp.eq.s32.totalorder %s18, 1
    %p246 = scmp.ne.s32.totalorder %s241, %s243
    %p247 = scmp.eq.s32.totalorder %s18, 0
    %p248 = por %p246, %p247
    %p249 = scmp.ne.s32.totalorder %s241, %s243
    %p250 = scmp.eq.s32.totalorder %s23, 1
    %p251 = por %p249, %p250
    %p252 = scmp.ne.s32.totalorder %s243, %s244
    %p253 = scmp.eq.s32.totalorder %s23, 0
    %p254 = por %p252, %p253
    %p255 = scmp.ne.s32.totalorder %s243, %s244
    %p256 = scmp.eq.s32.totalorder %s24, 1
    %p257 = por %p255, %p256
    %p259 = scmp.ne.s32.totalorder %s244, %s258
    %p260 = scmp.eq.s32.totalorder %s24, 0
    %p261 = por %p259, %p260
    %s263 = sadd.s32 %s262, 1
    %p266 = scmp.eq.s32.totalorder %s18, 1
    %p267 = scmp.ne.s32.totalorder %s262, %s264
    %p268 = scmp.eq.s32.totalorder %s18, 0
    %p269 = por %p267, %p268
    %p270 = scmp.ne.s32.totalorder %s262, %s264
    %p271 = scmp.eq.s32.totalorder %s23, 1
    %p272 = por %p270, %p271
    %p273 = scmp.ne.s32.totalorder %s264, %s265
    %p274 = scmp.eq.s32.totalorder %s23, 0
    %p275 = por %p273, %p274
    %p276 = scmp.ne.s32.totalorder %s264, %s265
    %p277 = scmp.eq.s32.totalorder %s24, 1
    %p278 = por %p276, %p277
    %p280 = scmp.ne.s32.totalorder %s265, %s279
    %p281 = scmp.eq.s32.totalorder %s24, 0
    %p282 = por %p280, %p281
    %s283 = ssub.s32 %s18, %s25
    %p284 = scmp.eq.s32.totalorder %s283, 0
    %s286 = sadd.s32 %s285, 1
    %s287 = scalar_select %p284, %s285, %s286
    %p290 = pneg %p284
    %p291 = scmp.eq.s32.totalorder %s18, 1
    %p292 = por %p290, %p291
    %p293 = scmp.ne.s32.totalorder %s285, %s288
    %p294 = scmp.eq.s32.totalorder %s18, 0
    %p295 = por %p293, %p294
    %p296 = scmp.ne.s32.totalorder %s285, %s288
    %p297 = scmp.eq.s32.totalorder %s23, 1
    %p298 = por %p296, %p297
    %p299 = scmp.ne.s32.totalorder %s288, %s289
    %p300 = scmp.eq.s32.totalorder %s23, 0
    %p301 = por %p299, %p300
    %p302 = scmp.ne.s32.totalorder %s288, %s289
    %p303 = scmp.eq.s32.totalorder %s24, 1
    %p304 = por %p302, %p303
    %p306 = scmp.ne.s32.totalorder %s289, %s305
    %p307 = scmp.eq.s32.totalorder %s24, 0
    %p308 = por %p306, %p307
    %p309 = scmp.le.s32.totalorder 1, %s18
    %p310 = scmp.lt.s32.totalorder %s18, 3
    %p311 = pnand %p309, %p310
    %p312 = pneg %p311
    // Predicated region
    $region9: #{residual_dense_block.1} parent=5 // pred_check
      _
    $region10: #{residual_dense_block.1} parent=5 // pred_check_branch
      %314 = sbr.rel (%p311) target = $region12
    $region11: #{residual_dense_block.1} parent=5 // pred_region
      %s315 = ssub.s32 %s18, 1
      // Predicated region
      $region13: #{residual_dense_block.1} parent=11 // pred_check
        %p316 = pneg %p65
      $region14: #{residual_dense_block.1} parent=11 // pred_check_branch
        %318 = sbr.rel (%p316) target = $region16
      $region15: #{residual_dense_block.1} parent=11 // pred_region
        _
      $region16: #{residual_dense_block.1} parent=11 // pred_fallthru
        _
      // Predicated region
      $region17: #{residual_dense_block.1} parent=11 // pred_check
        %p319 = pneg %p86
      $region18: #{residual_dense_block.1} parent=11 // pred_check_branch
        %321 = sbr.rel (%p319) target = $region20
      $region19: #{residual_dense_block.1} parent=11 // pred_region
        _
      $region20: #{residual_dense_block.1} parent=11 // pred_fallthru
        _
      // Predicated region
      $region21: #{residual_dense_block.1} parent=11 // pred_check
        %p322 = pneg %p107
      $region22: #{residual_dense_block.1} parent=11 // pred_check_branch
        %324 = sbr.rel (%p322) target = $region24
      $region23: #{residual_dense_block.1} parent=11 // pred_region
        _
      $region24: #{residual_dense_block.1} parent=11 // pred_fallthru
        _
      // Predicated region
      $region25: #{residual_dense_block.1} parent=11 // pred_check
        %p325 = pneg %p128
      $region26: #{residual_dense_block.1} parent=11 // pred_check_branch
        %327 = sbr.rel (%p325) target = $region28
      $region27: #{residual_dense_block.1} parent=11 // pred_region
        _
      $region28: #{residual_dense_block.1} parent=11 // pred_fallthru
        _
      // Predicated region
      $region29: #{residual_dense_block.1} parent=11 // pred_check
        %p328 = pneg %p149
      $region30: #{residual_dense_block.1} parent=11 // pred_check_branch
        %330 = sbr.rel (%p328) target = $region32
      $region31: #{residual_dense_block.1} parent=11 // pred_region
        _
      $region32: #{residual_dense_block.1} parent=11 // pred_fallthru
        _
      // Predicated region
      $region33: #{residual_dense_block.1} parent=11 // pred_check
        %p331 = pneg %p170
      $region34: #{residual_dense_block.1} parent=11 // pred_check_branch
        %333 = sbr.rel (%p331) target = $region36
      $region35: #{residual_dense_block.1} parent=11 // pred_region
        _
      $region36: #{residual_dense_block.1} parent=11 // pred_fallthru
        _
      // Predicated region
      $region37: #{residual_dense_block.1} parent=11 // pred_check
        %p334 = pneg %p191
      $region38: #{residual_dense_block.1} parent=11 // pred_check_branch
        %336 = sbr.rel (%p334) target = $region40
      $region39: #{residual_dense_block.1} parent=11 // pred_region
        _
      $region40: #{residual_dense_block.1} parent=11 // pred_fallthru
        _
      // Predicated region
      $region41: #{residual_dense_block.1} parent=11 // pred_check
        %p337 = pneg %p212
      $region42: #{residual_dense_block.1} parent=11 // pred_check_branch
        %339 = sbr.rel (%p337) target = $region44
      $region43: #{residual_dense_block.1} parent=11 // pred_region
        _
      $region44: #{residual_dense_block.1} parent=11 // pred_fallthru
        _
      // Predicated region
      $region45: #{residual_dense_block.1} parent=11 // pred_check
        %p340 = pneg %p233
      $region46: #{residual_dense_block.1} parent=11 // pred_check_branch
        %342 = sbr.rel (%p340) target = $region48
      $region47: #{residual_dense_block.1} parent=11 // pred_region
        _
      $region48: #{residual_dense_block.1} parent=11 // pred_fallthru
        _
      // Predicated region
      $region49: #{residual_dense_block.1} parent=11 // pred_check
        %p343 = pneg %p254
      $region50: #{residual_dense_block.1} parent=11 // pred_check_branch
        %345 = sbr.rel (%p343) target = $region52
      $region51: #{residual_dense_block.1} parent=11 // pred_region
        _
      $region52: #{residual_dense_block.1} parent=11 // pred_fallthru
        _
      // Predicated region
      $region53: #{residual_dense_block.1} parent=11 // pred_check
        %p346 = pneg %p275
      $region54: #{residual_dense_block.1} parent=11 // pred_check_branch
        %348 = sbr.rel (%p346) target = $region56
      $region55: #{residual_dense_block.1} parent=11 // pred_region
        _
      $region56: #{residual_dense_block.1} parent=11 // pred_fallthru
        _
    $region12: #{residual_dense_block.1} parent=5 // pred_fallthru
      _
    %p349 = scmp.lt.s32.totalorder %s18, 2
    // Predicated region
    $region57: #{residual_dense_block.1} parent=5 // pred_check
      %p350 = pneg %p349
    $region58: #{residual_dense_block.1} parent=5 // pred_check_branch
      %352 = sbr.rel (%p350) target = $region60
    $region59: #{residual_dense_block.1} parent=5 // pred_region
      // Predicated region
      $region61: #{residual_dense_block.1} parent=59 // pred_check
        %p353 = pneg %p38
      $region62: #{residual_dense_block.1} parent=59 // pred_check_branch
        %355 = sbr.rel (%p353) target = $region64
      $region63: #{residual_dense_block.1} parent=59 // pred_region
        %p356 = scmp.lt.s32.totalorder %s18, 1
        %s357 = scalar_select %p356, %s18, 1
        %s358 = smul.addr %s357, 2
        %s359 = smul.addr %s358, 8
        %s360 = scalar_lea.vmem %s0, %s359
      $region64: #{residual_dense_block.1} parent=59 // pred_fallthru
        _
    $region60: #{residual_dense_block.1} parent=5 // pred_fallthru
      _
    %p361 = scmp.le.s32.totalorder 1, %s18
    %p362 = scmp.lt.s32.totalorder %s18, 3
    %p363 = pnand %p361, %p362
    %p364 = pneg %p363
    // Predicated region
    $region65: #{residual_dense_block.1} parent=5 // pred_check
      _
    $region66: #{residual_dense_block.1} parent=5 // pred_check_branch
      %366 = sbr.rel (%p363) target = $region68
    $region67: #{residual_dense_block.1} parent=5 // pred_region
      %s367 = ssub.s32 %s18, 1
      %p368 = scmp.lt.s32.totalorder %s23, 1
      %s369 = scalar_select %p368, %s23, 1
      %s370 = smul.addr %s369, 2
      %s371 = smul.addr %s370, 8
      %s372 = scalar_lea.vmem %s0, %s371
      %p373 = pneg %p44
      %p374 = pneg %p41
      %p375 = pneg %p65
      %p376 = pneg %p62
      %p377 = pneg %p86
      %p378 = pneg %p83
      %p379 = pneg %p107
      %p380 = pneg %p104
      %p381 = pneg %p128
      %p382 = pneg %p125
      %p383 = pneg %p149
      %p384 = pneg %p146
      %p385 = pneg %p170
      %p386 = pneg %p167
      %p387 = pneg %p191
      %p388 = pneg %p188
      %p389 = pneg %p212
      %p390 = pneg %p209
      %p391 = pneg %p233
      %p392 = pneg %p230
      %p393 = pneg %p254
      %p394 = pneg %p251
      %p395 = pneg %p275
      %p396 = pneg %p272
      %p397 = pneg %p301
      %p398 = pneg %p298
      %p399 = scmp.lt.s32.totalorder %s23, 1
      %s400 = scalar_select %p399, %s23, 1
      %s401 = smul.addr %s400, 2
      %s402 = smul.addr %s401, 8
      %s403 = scalar_lea.vmem %s12, %s402
      %p404 = scmp.lt.s32.totalorder %s23, 1
      %s405 = scalar_select %p404, %s23, 1
      %s406 = smul.addr %s405, 2
      %s407 = smul.addr %s406, 8
      %s408 = scalar_lea.vmem %s0, %s407
      %p409 = scmp.lt.s32.totalorder %s23, 1
      %s410 = scalar_select %p409, %s23, 1
      %s411 = smul.addr %s410, 2
      %s412 = smul.addr %s411, 8
      %s413 = scalar_lea.vmem %s12, %s412
      %414 = vst [vmem:[#allocation3] sm:$0xff] 0.0
      %415 = vst [vmem:[#allocation3 + $0x20] sm:$0xff] 0.0
      %416 = vst [vmem:[#allocation3 + $0x40] sm:$0xff] 0.0
      %417 = vst [vmem:[#allocation3 + $0x60] sm:$0xff] 0.0
      %418 = vst [vmem:[#allocation3 + $0x80] sm:$0xff] 0.0
      %419 = vst [vmem:[#allocation3 + $0xa0] sm:$0xff] 0.0
      %420 = vst [vmem:[#allocation3 + $0xc0] sm:$0xff] 0.0
      %421 = vst [vmem:[#allocation3 + $0xe0] sm:$0xff] 0.0
      %422 = vst [vmem:[#allocation3 + $0x100] sm:$0xff] 0.0
      %423 = vst [vmem:[#allocation3 + $0x18] sm:$0xff] 0.0
      %424 = vst [vmem:[#allocation3 + $0x38] sm:$0xff] 0.0
      %425 = vst [vmem:[#allocation3 + $0x58] sm:$0xff] 0.0
      %426 = vst [vmem:[#allocation3 + $0x78] sm:$0xff] 0.0
      %427 = vst [vmem:[#allocation3 + $0x98] sm:$0xff] 0.0
      %428 = vst [vmem:[#allocation3 + $0xb8] sm:$0xff] 0.0
      %429 = vst [vmem:[#allocation3 + $0xd8] sm:$0xff] 0.0
      %430 = vst [vmem:[#allocation3 + $0xf8] sm:$0xff] 0.0
      %431 = vst [vmem:[#allocation3 + $0x118] sm:$0xff] 0.0
      %v432 = vld [vmem:[%s408] sm:$0xff]
      %v433 = vld [vmem:[%s408 + $0x8] sm:$0xff]
      %434 = vst [vmem:[#allocation2] sm:$0xff] %v432
      %435 = vst [vmem:[#allocation2 + $0x8] sm:$0xff] %v433
      %v436 = vld [vmem:[%s1] ss:$2 sm:$0x3]
      %s437 = scalar_lea.vmem %s1, 1
      %v438 = vld [vmem:[%s437] ss:$2 sm:$0x3]
      %v439 = vld [vmem:[#allocation2] sm:$0xff]
      %v440 = vld [vmem:[#allocation2 + $0x8] sm:$0xff]
      %v441 = vld [vmem:[%s2] sm:$0xff]
      %v442 = vld [vmem:[%s2 + $0x8] sm:$0xff]
      %v443 = vld [vmem:[%s2 + $0x10] sm:$0xff]
      %v444 = vld [vmem:[%s2 + $0x18] sm:$0xff]
      %v445 = vld [vmem:[%s2 + $0x20] sm:$0xff]
      %v446 = vld [vmem:[%s2 + $0x28] sm:$0xff]
      %v447 = vld [vmem:[%s2 + $0x30] sm:$0xff]
      %v448 = vld [vmem:[%s2 + $0x38] sm:$0xff]
      %v449 = vld [vmem:[%s2 + $0x40] sm:$0xff]
      %vm450 = vcmask 64512
      %v452 = vsel %vm450, %v441, 0
      %v455 = vsel %vm450, %v442, 0
      %v458 = vsel %vm450, %v443, 0
      %v461 = vsel %vm450, %v444, 0
      %v464 = vsel %vm450, %v445, 0
      %v467 = vsel %vm450, %v446, 0
      %v470 = vsel %vm450, %v447, 0
      %v473 = vsel %vm450, %v448, 0
      %v476 = vsel %vm450, %v449, 0
      %478 = vmatpush.msra.mxu0 0.0
      %479 = vmatpush.msra.mxu0 0.0
      %480 = vmatpush.msra.mxu0 0.0
      %481 = vmatpush.msra.mxu0 0.0
      %482 = vmatpush.msra.mxu0 0.0
      %483 = vmatpush.msra.mxu0 0.0
      %484 = vmatpush.msra.mxu0 0.0
      %485 = vmatpush.msra.mxu0 0.0
      %486 = vmatpush.msra.mxu0 0.0
      %487 = vmatpush.msra.mxu0 0.0
      %488 = vmatpush.msra.mxu0 0.0
      %489 = vmatpush.msra.mxu0 0.0
      %490 = vmatpush.msra.mxu0 0.0
      %491 = vmatpush.msra.mxu0 0.0
      %492 = vmatpush.msra.mxu0 0.0
      %493 = vmatpush.msra.mxu0 %v439
      %494 = vmatmul.f32.gmra.mxu0 %v452
      %v495 = vpop.f32.mrf.mxu0
      %v496 = vadd.f32 0.0, %v495
      %497 = vmatmul.f32.gmra.mxu0 %v455
      %v498 = vpop.f32.mrf.mxu0
      %v499 = vadd.f32 0.0, %v498
      %500 = vmatmul.f32.gmra.mxu0 %v458
      %v501 = vpop.f32.mrf.mxu0
      %v502 = vadd.f32 0.0, %v501
      %503 = vmatmul.f32.gmra.mxu0 %v461
      %v504 = vpop.f32.mrf.mxu0
      %v505 = vadd.f32 0.0, %v504
      %506 = vmatmul.f32.gmra.mxu0 %v464
      %v507 = vpop.f32.mrf.mxu0
      %v508 = vadd.f32 0.0, %v507
      %509 = vmatmul.f32.gmra.mxu0 %v467
      %v510 = vpop.f32.mrf.mxu0
      %v511 = vadd.f32 0.0, %v510
      %512 = vmatmul.f32.gmra.mxu0 %v470
      %v513 = vpop.f32.mrf.mxu0
      %v514 = vadd.f32 0.0, %v513
      %515 = vmatmul.f32.gmra.mxu0 %v473
      %v516 = vpop.f32.mrf.mxu0
      %v517 = vadd.f32 0.0, %v516
      %518 = vmatmul.f32.gmra.mxu0 %v476
      %v519 = vpop.f32.mrf.mxu0
      %v520 = vadd.f32 0.0, %v519
      %521 = vdwg.mxu0
      %522 = vmatpush.msra.mxu0 0.0
      %523 = vmatpush.msra.mxu0 0.0
      %524 = vmatpush.msra.mxu0 0.0
      %525 = vmatpush.msra.mxu0 0.0
      %526 = vmatpush.msra.mxu0 0.0
      %527 = vmatpush.msra.mxu0 0.0
      %528 = vmatpush.msra.mxu0 0.0
      %529 = vmatpush.msra.mxu0 0.0
      %530 = vmatpush.msra.mxu0 0.0
      %531 = vmatpush.msra.mxu0 0.0
      %532 = vmatpush.msra.mxu0 0.0
      %533 = vmatpush.msra.mxu0 0.0
      %534 = vmatpush.msra.mxu0 0.0
      %535 = vmatpush.msra.mxu0 0.0
      %536 = vmatpush.msra.mxu0 0.0
      %537 = vmatpush.msra.mxu0 %v440
      %538 = vmatmul.f32.gmra.mxu0 %v452
      %v539 = vpop.f32.mrf.mxu0
      %v540 = vadd.f32 0.0, %v539
      %541 = vmatmul.f32.gmra.mxu0 %v455
      %v542 = vpop.f32.mrf.mxu0
      %v543 = vadd.f32 0.0, %v542
      %544 = vmatmul.f32.gmra.mxu0 %v458
      %v545 = vpop.f32.mrf.mxu0
      %v546 = vadd.f32 0.0, %v545
      %547 = vmatmul.f32.gmra.mxu0 %v461
      %v548 = vpop.f32.mrf.mxu0
      %v549 = vadd.f32 0.0, %v548
      %550 = vmatmul.f32.gmra.mxu0 %v464
      %v551 = vpop.f32.mrf.mxu0
      %v552 = vadd.f32 0.0, %v551
      %553 = vmatmul.f32.gmra.mxu0 %v467
      %v554 = vpop.f32.mrf.mxu0
      %v555 = vadd.f32 0.0, %v554
      %556 = vmatmul.f32.gmra.mxu0 %v470
      %v557 = vpop.f32.mrf.mxu0
      %v558 = vadd.f32 0.0, %v557
      %559 = vmatmul.f32.gmra.mxu0 %v473
      %v560 = vpop.f32.mrf.mxu0
      %v561 = vadd.f32 0.0, %v560
      %562 = vmatmul.f32.gmra.mxu0 %v476
      %v563 = vpop.f32.mrf.mxu0
      %v564 = vadd.f32 0.0, %v563
      %565 = vdwg.mxu0
      %566 = vst [vmem:[#allocation3 + $0x8] sm:$0xff] %v496
      %567 = vst [vmem:[#allocation3 + $0x10] sm:$0xff] %v540
      %568 = vst [vmem:[#allocation3 + $0x28] sm:$0xff] %v499
      %569 = vst [vmem:[#allocation3 + $0x30] sm:$0xff] %v543
      %570 = vst [vmem:[#allocation3 + $0x48] sm:$0xff] %v502
      %571 = vst [vmem:[#allocation3 + $0x50] sm:$0xff] %v546
      %572 = vst [vmem:[#allocation3 + $0x68] sm:$0xff] %v505
      %573 = vst [vmem:[#allocation3 + $0x70] sm:$0xff] %v549
      %574 = vst [vmem:[#allocation3 + $0x88] sm:$0xff] %v508
      %575 = vst [vmem:[#allocation3 + $0x90] sm:$0xff] %v552
      %576 = vst [vmem:[#allocation3 + $0xa8] sm:$0xff] %v511
      %577 = vst [vmem:[#allocation3 + $0xb0] sm:$0xff] %v555
      %578 = vst [vmem:[#allocation3 + $0xc8] sm:$0xff] %v514
      %579 = vst [vmem:[#allocation3 + $0xd0] sm:$0xff] %v558
      %580 = vst [vmem:[#allocation3 + $0xe8] sm:$0xff] %v517
      %581 = vst [vmem:[#allocation3 + $0xf0] sm:$0xff] %v561
      %582 = vst [vmem:[#allocation3 + $0x108] sm:$0xff] %v520
      %583 = vst [vmem:[#allocation3 + $0x110] sm:$0xff] %v564
      %v584 = vld [vmem:[#allocation3] sm:$0xff]
      %v585 = vld [vmem:[#allocation3 + $0x8] sm:$0xff]
      %v586 = vld [vmem:[#allocation3 + $0x10] sm:$0xff]
      %v588 = vperm.slane %v436, 0
      %v589 = vperm.slane %v436, 1
      %590 = vrot.lane.b32.xlu0 %v588, 111
      %v591 = vpop.permute.xlu0 %590
      %592 = vrot.lane.b32.xlu0 %v589, 111
      %v593 = vpop.permute.xlu0 %592
      %vm594 = vcmask 908288
      %v595 = vsel %vm594, %v591, %v593
      %v599 = vmul.f32 %v584, %v591
      %v600 = vmul.f32 %v585, %v595
      %v601 = vmul.f32 %v586, %v593
      %v602 = vadd.f32 %v599, 0.0
      %v603 = vadd.f32 %v600, 0.0
      %v604 = vadd.f32 %v601, 0.0
      %v605 = vld [vmem:[#allocation3 + $0x20] sm:$0xff]
      %v606 = vld [vmem:[#allocation3 + $0x28] sm:$0xff]
      %v607 = vld [vmem:[#allocation3 + $0x30] sm:$0xff]
      %611 = vrot.lane.b32.xlu0 %v605, 127
      %v612 = vpop.permute.xlu0 %611
      %613 = vrot.lane.b32.xlu0 %v606, 127
      %v614 = vpop.permute.xlu0 %613
      %615 = vrot.lane.b32.xlu0 %v607, 127
      %v616 = vpop.permute.xlu0 %615
      %vm617 = vcmask 1039360
      %v618 = vsel %vm617, %v612, %v614
      %v619 = vsel %vm617, %v614, %v616
      %v623 = vadd.f32 %v602, %v618
      %v624 = vadd.f32 %v603, %v619
      %v625 = vadd.f32 %v604, %v616
      %v626 = vld [vmem:[#allocation3 + $0x40] sm:$0xff]
      %v627 = vld [vmem:[#allocation3 + $0x48] sm:$0xff]
      %v628 = vld [vmem:[#allocation3 + $0x50] sm:$0xff]
      %v630 = vperm.slane %v438, 0
      %v631 = vperm.slane %v438, 1
      %632 = vrot.lane.b32.xlu0 %v630, 113
      %v633 = vpop.permute.xlu0 %632
      %634 = vrot.lane.b32.xlu0 %v631, 113
      %v635 = vpop.permute.xlu0 %634
      %vm636 = vcmask 924672
      %v637 = vsel %vm636, %v633, %v635
      %v641 = vmul.f32 %v626, %v633
      %v642 = vmul.f32 %v627, %v637
      %v643 = vmul.f32 %v628, %v635
      %647 = vrot.lane.b32.xlu0 %v641, 126
      %v648 = vpop.permute.xlu0 %647
      %649 = vrot.lane.b32.xlu0 %v642, 126
      %v650 = vpop.permute.xlu0 %649
      %651 = vrot.lane.b32.xlu0 %v643, 126
      %v652 = vpop.permute.xlu0 %651
      %vm653 = vcmask 1031168
      %v654 = vsel %vm653, %v648, %v650
      %v655 = vsel %vm653, %v650, %v652
      %v659 = vadd.f32 %v623, %v654
      %v660 = vadd.f32 %v624, %v655
      %v661 = vadd.f32 %v625, %v652
      %v662 = vld [vmem:[#allocation3 + $0x60] sm:$0xff]
      %v663 = vld [vmem:[#allocation3 + $0x68] sm:$0xff]
      %v664 = vld [vmem:[#allocation3 + $0x70] sm:$0xff]
      %665 = vrot.lane.b32.xlu0 %v588, 127
      %v666 = vpop.permute.xlu0 %665
      %667 = vrot.lane.b32.xlu0 %v589, 127
      %v668 = vpop.permute.xlu0 %667
      %v669 = vsel %vm617, %v666, %v668
      %v673 = vmul.f32 %v662, %v666
      %v674 = vmul.f32 %v663, %v669
      %v675 = vmul.f32 %v664, %v668
      %679 = vrot.lane.b32.xlu0 %v673, 112
      %v680 = vpop.permute.xlu0 %679
      %681 = vrot.lane.b32.xlu0 %v674, 112
      %v682 = vpop.permute.xlu0 %681
      %683 = vrot.lane.b32.xlu0 %v675, 112
      %v684 = vpop.permute.xlu0 %683
      %vm685 = vcmask 916480
      %v686 = vsel %vm685, %v680, %v682
      %v687 = vsel %vm685, %v682, %v684
      %v691 = vadd.f32 %v659, %v686
      %v692 = vadd.f32 %v660, %v687
      %v693 = vadd.f32 %v661, %v684
      %v694 = vld [vmem:[#allocation3 + $0x88] sm:$0xff]
      %v695 = vld [vmem:[#allocation3 + $0x90] sm:$0xff]
      %698 = vrot.lane.b32.xlu0 %v694, 111
      %v699 = vpop.permute.xlu0 %698
      %700 = vrot.lane.b32.xlu0 %v695, 111
      %v701 = vpop.permute.xlu0 %700
      %v702 = vsel %vm594, %v699, %v701
      %v706 = vadd.f32 %v691, %v699
      %v707 = vadd.f32 %v692, %v702
      %v708 = vadd.f32 %v693, %v701
      %v709 = vld [vmem:[#allocation3 + $0xa8] sm:$0xff]
      %v710 = vld [vmem:[#allocation3 + $0xb0] sm:$0xff]
      %v711 = vld [vmem:[#allocation3 + $0xb8] sm:$0xff]
      %712 = vrot.lane.b32.xlu0 %v630, 1
      %v713 = vpop.permute.xlu0 %712
      %714 = vrot.lane.b32.xlu0 %v631, 1
      %v715 = vpop.permute.xlu0 %714
      %vm716 = vcmask 7168
      %v717 = vsel %vm716, %v713, %v715
      %v721 = vmul.f32 %v709, %v713
      %v722 = vmul.f32 %v710, %v717
      %v723 = vmul.f32 %v711, %v715
      %727 = vrot.lane.b32.xlu0 %v721, 110
      %v728 = vpop.permute.xlu0 %727
      %729 = vrot.lane.b32.xlu0 %v722, 110
      %v730 = vpop.permute.xlu0 %729
      %731 = vrot.lane.b32.xlu0 %v723, 110
      %v732 = vpop.permute.xlu0 %731
      %vm733 = vcmask 900096
      %v734 = vsel %vm733, %v728, %v730
      %v735 = vsel %vm733, %v730, %v732
      %v739 = vadd.f32 %v706, %v728
      %v740 = vadd.f32 %v707, %v734
      %v741 = vadd.f32 %v708, %v735
      %v742 = vld [vmem:[#allocation3 + $0xc8] sm:$0xff]
      %v743 = vld [vmem:[#allocation3 + $0xd0] sm:$0xff]
      %v744 = vld [vmem:[#allocation3 + $0xd8] sm:$0xff]
      %745 = vrot.lane.b32.xlu0 %v588, 15
      %v746 = vpop.permute.xlu0 %745
      %747 = vrot.lane.b32.xlu0 %v589, 15
      %v748 = vpop.permute.xlu0 %747
      %vm749 = vcmask 121856
      %v750 = vsel %vm749, %v746, %v748
      %v754 = vmul.f32 %v742, %v746
      %v755 = vmul.f32 %v743, %v750
      %v756 = vmul.f32 %v744, %v748
      %760 = vrot.lane.b32.xlu0 %v754, 96
      %v761 = vpop.permute.xlu0 %760
      %762 = vrot.lane.b32.xlu0 %v755, 96
      %v763 = vpop.permute.xlu0 %762
      %764 = vrot.lane.b32.xlu0 %v756, 96
      %v765 = vpop.permute.xlu0 %764
      %vm766 = vcmask 785408
      %v767 = vsel %vm766, %v761, %v763
      %v768 = vsel %vm766, %v763, %v765
      %v772 = vadd.f32 %v739, %v761
      %v773 = vadd.f32 %v740, %v767
      %v774 = vadd.f32 %v741, %v768
      %v775 = vld [vmem:[#allocation3 + $0xe8] sm:$0xff]
      %v776 = vld [vmem:[#allocation3 + $0xf0] sm:$0xff]
      %v777 = vld [vmem:[#allocation3 + $0xf8] sm:$0xff]
      %781 = vrot.lane.b32.xlu0 %v775, 95
      %v782 = vpop.permute.xlu0 %781
      %783 = vrot.lane.b32.xlu0 %v776, 95
      %v784 = vpop.permute.xlu0 %783
      %785 = vrot.lane.b32.xlu0 %v777, 95
      %v786 = vpop.permute.xlu0 %785
      %vm787 = vcmask 777216
      %v788 = vsel %vm787, %v782, %v784
      %v789 = vsel %vm787, %v784, %v786
      %v793 = vadd.f32 %v772, %v782
      %v794 = vadd.f32 %v773, %v788
      %v795 = vadd.f32 %v774, %v789
      %v796 = vld [vmem:[#allocation3 + $0x108] sm:$0xff]
      %v797 = vld [vmem:[#allocation3 + $0x110] sm:$0xff]
      %v798 = vld [vmem:[#allocation3 + $0x118] sm:$0xff]
      %799 = vrot.lane.b32.xlu0 %v630, 17
      %v800 = vpop.permute.xlu0 %799
      %801 = vrot.lane.b32.xlu0 %v631, 17
      %v802 = vpop.permute.xlu0 %801
      %vm803 = vcmask 138240
      %v804 = vsel %vm803, %v800, %v802
      %v808 = vmul.f32 %v796, %v800
      %v809 = vmul.f32 %v797, %v804
      %v810 = vmul.f32 %v798, %v802
      %814 = vrot.lane.b32.xlu0 %v808, 94
      %v815 = vpop.permute.xlu0 %814
      %816 = vrot.lane.b32.xlu0 %v809, 94
      %v817 = vpop.permute.xlu0 %816
      %818 = vrot.lane.b32.xlu0 %v810, 94
      %v819 = vpop.permute.xlu0 %818
      %vm820 = vcmask 769024
      %v821 = vsel %vm820, %v815, %v817
      %v822 = vsel %vm820, %v817, %v819
      %v826 = vadd.f32 %v793, %v815
      %v827 = vadd.f32 %v794, %v821
      %v828 = vadd.f32 %v795, %v822
      %v829 = vld [vmem:[%s3] sm:$0xff]
      %831 = vset.pattern.permute.xlu0 0
      %832 = vperm.xlu0 %831, %v829
      %v833 = vpop.permute.xlu0 %832
      %v835 = vadd.f32 %v826, %v833
      %v836 = vadd.f32 %v827, %v833
      %v837 = vadd.f32 %v828, %v833
      %vm838 = vcmp.ge.f32.partialorder %v835, 0.0
      %vm839 = vcmp.ge.f32.partialorder %v836, 0.0
      %vm840 = vcmp.ge.f32.partialorder %v837, 0.0
      %v841 = vmul.f32 %v835, 0.2
      %v842 = vmul.f32 %v836, 0.2
      %v843 = vmul.f32 %v837, 0.2
      %v844 = vsel %vm838, %v835, %v841
      %v845 = vsel %vm839, %v836, %v842
      %v846 = vsel %vm840, %v837, %v843
      %850 = vrot.lane.b32.xlu0 %v844, 17
      %v851 = vpop.permute.xlu0 %850
      %852 = vrot.lane.b32.xlu0 %v845, 17
      %v853 = vpop.permute.xlu0 %852
      %854 = vrot.lane.b32.xlu0 %v846, 17
      %v855 = vpop.permute.xlu0 %854
      %v856 = vsel %vm803, %v851, %v853
      %v857 = vsel %vm803, %v853, %v855
      %860 = vst [vmem:[#allocation2 + $0x10] sm:$0xff] %v856
      %861 = vst [vmem:[#allocation2 + $0x18] sm:$0xff] %v857
      %v862 = vld [vmem:[#allocation2] sm:$0xff]
      %v863 = vld [vmem:[#allocation2 + $0x8] sm:$0xff]
      %v864 = vld [vmem:[#allocation2 + $0x10] sm:$0xff]
      %v865 = vld [vmem:[#allocation2 + $0x18] sm:$0xff]
      %v866 = vld [vmem:[%s4] sm:$0xff]
      %v867 = vld [vmem:[%s4 + $0x8] sm:$0xff]
      %v868 = vld [vmem:[%s4 + $0x10] sm:$0xff]
      %v869 = vld [vmem:[%s4 + $0x18] sm:$0xff]
      %v870 = vld [vmem:[%s4 + $0x20] sm:$0xff]
      %v871 = vld [vmem:[%s4 + $0x28] sm:$0xff]
      %v872 = vld [vmem:[%s4 + $0x30] sm:$0xff]
      %v873 = vld [vmem:[%s4 + $0x38] sm:$0xff]
      %v874 = vld [vmem:[%s4 + $0x40] sm:$0xff]
      %vm875 = vcmask 130048
      %v877 = vsel %vm875, %v866, 0
      %v880 = vsel %vm875, %v867, 0
      %v883 = vsel %vm875, %v868, 0
      %v886 = vsel %vm875, %v869, 0
      %v889 = vsel %vm875, %v870, 0
      %v892 = vsel %vm875, %v871, 0
      %v895 = vsel %vm875, %v872, 0
      %v898 = vsel %vm875, %v873, 0
      %v901 = vsel %vm875, %v874, 0
      %903 = vmatpush.msra.mxu0 0.0
      %904 = vmatpush.msra.mxu0 0.0
      %905 = vmatpush.msra.mxu0 0.0
      %906 = vmatpush.msra.mxu0 0.0
      %907 = vmatpush.msra.mxu0 0.0
      %908 = vmatpush.msra.mxu0 0.0
      %909 = vmatpush.msra.mxu0 0.0
      %910 = vmatpush.msra.mxu0 0.0
      %911 = vmatpush.msra.mxu0 0.0
      %912 = vmatpush.msra.mxu0 0.0
      %913 = vmatpush.msra.mxu0 0.0
      %914 = vmatpush.msra.mxu0 0.0
      %915 = vmatpush.msra.mxu0 0.0
      %916 = vmatpush.msra.mxu0 0.0
      %917 = vmatpush.msra.mxu0 %v864
      %918 = vmatpush.msra.mxu0 %v862
      %919 = vmatmul.f32.gmra.mxu0 %v877
      %v920 = vpop.f32.mrf.mxu0
      %v921 = vadd.f32 0.0, %v920
      %922 = vmatmul.f32.gmra.mxu0 %v880
      %v923 = vpop.f32.mrf.mxu0
      %v924 = vadd.f32 0.0, %v923
      %925 = vmatmul.f32.gmra.mxu0 %v883
      %v926 = vpop.f32.mrf.mxu0
      %v927 = vadd.f32 0.0, %v926
      %928 = vmatmul.f32.gmra.mxu0 %v886
      %v929 = vpop.f32.mrf.mxu0
      %v930 = vadd.f32 0.0, %v929
      %931 = vmatmul.f32.gmra.mxu0 %v889
      %v932 = vpop.f32.mrf.mxu0
      %v933 = vadd.f32 0.0, %v932
      %934 = vmatmul.f32.gmra.mxu0 %v892
      %v935 = vpop.f32.mrf.mxu0
      %v936 = vadd.f32 0.0, %v935
      %937 = vmatmul.f32.gmra.mxu0 %v895
      %v938 = vpop.f32.mrf.mxu0
      %v939 = vadd.f32 0.0, %v938
      %940 = vmatmul.f32.gmra.mxu0 %v898
      %v941 = vpop.f32.mrf.mxu0
      %v942 = vadd.f32 0.0, %v941
      %943 = vmatmul.f32.gmra.mxu0 %v901
      %v944 = vpop.f32.mrf.mxu0
      %v945 = vadd.f32 0.0, %v944
      %946 = vdwg.mxu0
      %947 = vmatpush.msra.mxu0 0.0
      %948 = vmatpush.msra.mxu0 0.0
      %949 = vmatpush.msra.mxu0 0.0
      %950 = vmatpush.msra.mxu0 0.0
      %951 = vmatpush.msra.mxu0 0.0
      %952 = vmatpush.msra.mxu0 0.0
      %953 = vmatpush.msra.mxu0 0.0
      %954 = vmatpush.msra.mxu0 0.0
      %955 = vmatpush.msra.mxu0 0.0
      %956 = vmatpush.msra.mxu0 0.0
      %957 = vmatpush.msra.mxu0 0.0
      %958 = vmatpush.msra.mxu0 0.0
      %959 = vmatpush.msra.mxu0 0.0
      %960 = vmatpush.msra.mxu0 0.0
      %961 = vmatpush.msra.mxu0 %v865
      %962 = vmatpush.msra.mxu0 %v863
      %963 = vmatmul.f32.gmra.mxu0 %v877
      %v964 = vpop.f32.mrf.mxu0
      %v965 = vadd.f32 0.0, %v964
      %966 = vmatmul.f32.gmra.mxu0 %v880
      %v967 = vpop.f32.mrf.mxu0
      %v968 = vadd.f32 0.0, %v967
      %969 = vmatmul.f32.gmra.mxu0 %v883
      %v970 = vpop.f32.mrf.mxu0
      %v971 = vadd.f32 0.0, %v970
      %972 = vmatmul.f32.gmra.mxu0 %v886
      %v973 = vpop.f32.mrf.mxu0
      %v974 = vadd.f32 0.0, %v973
      %975 = vmatmul.f32.gmra.mxu0 %v889
      %v976 = vpop.f32.mrf.mxu0
      %v977 = vadd.f32 0.0, %v976
      %978 = vmatmul.f32.gmra.mxu0 %v892
      %v979 = vpop.f32.mrf.mxu0
      %v980 = vadd.f32 0.0, %v979
      %981 = vmatmul.f32.gmra.mxu0 %v895
      %v982 = vpop.f32.mrf.mxu0
      %v983 = vadd.f32 0.0, %v982
      %984 = vmatmul.f32.gmra.mxu0 %v898
      %v985 = vpop.f32.mrf.mxu0
      %v986 = vadd.f32 0.0, %v985
      %987 = vmatmul.f32.gmra.mxu0 %v901
      %v988 = vpop.f32.mrf.mxu0
      %v989 = vadd.f32 0.0, %v988
      %990 = vdwg.mxu0
      %991 = vst [vmem:[#allocation3 + $0x8] sm:$0xff] %v921
      %992 = vst [vmem:[#allocation3 + $0x10] sm:$0xff] %v965
      %993 = vst [vmem:[#allocation3 + $0x28] sm:$0xff] %v924
      %994 = vst [vmem:[#allocation3 + $0x30] sm:$0xff] %v968
      %995 = vst [vmem:[#allocation3 + $0x48] sm:$0xff] %v927
      %996 = vst [vmem:[#allocation3 + $0x50] sm:$0xff] %v971
      %997 = vst [vmem:[#allocation3 + $0x68] sm:$0xff] %v930
      %998 = vst [vmem:[#allocation3 + $0x70] sm:$0xff] %v974
      %999 = vst [vmem:[#allocation3 + $0x88] sm:$0xff] %v933
      %1000 = vst [vmem:[#allocation3 + $0x90] sm:$0xff] %v977
      %1001 = vst [vmem:[#allocation3 + $0xa8] sm:$0xff] %v936
      %1002 = vst [vmem:[#allocation3 + $0xb0] sm:$0xff] %v980
      %1003 = vst [vmem:[#allocation3 + $0xc8] sm:$0xff] %v939
      %1004 = vst [vmem:[#allocation3 + $0xd0] sm:$0xff] %v983
      %1005 = vst [vmem:[#allocation3 + $0xe8] sm:$0xff] %v942
      %1006 = vst [vmem:[#allocation3 + $0xf0] sm:$0xff] %v986
      %1007 = vst [vmem:[#allocation3 + $0x108] sm:$0xff] %v945
      %1008 = vst [vmem:[#allocation3 + $0x110] sm:$0xff] %v989
      %v1009 = vld [vmem:[#allocation3] sm:$0xff]
      %v1010 = vld [vmem:[#allocation3 + $0x8] sm:$0xff]
      %v1011 = vld [vmem:[#allocation3 + $0x10] sm:$0xff]
      %v1012 = vmul.f32 %v1009, %v591
      %v1013 = vmul.f32 %v1010, %v595
      %v1014 = vmul.f32 %v1011, %v593
      %v1015 = vadd.f32 %v1012, 0.0
      %v1016 = vadd.f32 %v1013, 0.0
      %v1017 = vadd.f32 %v1014, 0.0
      %v1018 = vld [vmem:[#allocation3 + $0x20] sm:$0xff]
      %v1019 = vld [vmem:[#allocation3 + $0x28] sm:$0xff]
      %v1020 = vld [vmem:[#allocation3 + $0x30] sm:$0xff]
      %1024 = vrot.lane.b32.xlu0 %v1018, 127
      %v1025 = vpop.permute.xlu0 %1024
      %1026 = vrot.lane.b32.xlu0 %v1019, 127
      %v1027 = vpop.permute.xlu0 %1026
      %1028 = vrot.lane.b32.xlu0 %v1020, 127
      %v1029 = vpop.permute.xlu0 %1028
      %v1030 = vsel %vm617, %v1025, %v1027
      %v1031 = vsel %vm617, %v1027, %v1029
      %v1035 = vadd.f32 %v1015, %v1030
      %v1036 = vadd.f32 %v1016, %v1031
      %v1037 = vadd.f32 %v1017, %v1029
      %v1038 = vld [vmem:[#allocation3 + $0x40] sm:$0xff]
      %v1039 = vld [vmem:[#allocation3 + $0x48] sm:$0xff]
      %v1040 = vld [vmem:[#allocation3 + $0x50] sm:$0xff]
      %v1041 = vmul.f32 %v1038, %v633
      %v1042 = vmul.f32 %v1039, %v637
      %v1043 = vmul.f32 %v1040, %v635
      %1047 = vrot.lane.b32.xlu0 %v1041, 126
      %v1048 = vpop.permute.xlu0 %1047
      %1049 = vrot.lane.b32.xlu0 %v1042, 126
      %v1050 = vpop.permute.xlu0 %1049
      %1051 = vrot.lane.b32.xlu0 %v1043, 126
      %v1052 = vpop.permute.xlu0 %1051
      %v1053 = vsel %vm653, %v1048, %v1050
      %v1054 = vsel %vm653, %v1050, %v1052
      %v1058 = vadd.f32 %v1035, %v1053
      %v1059 = vadd.f32 %v1036, %v1054
      %v1060 = vadd.f32 %v1037, %v1052
      %v1061 = vld [vmem:[#allocation3 + $0x60] sm:$0xff]
      %v1062 = vld [vmem:[#allocation3 + $0x68] sm:$0xff]
      %v1063 = vld [vmem:[#allocation3 + $0x70] sm:$0xff]
      %v1064 = vmul.f32 %v1061, %v666
      %v1065 = vmul.f32 %v1062, %v669
      %v1066 = vmul.f32 %v1063, %v668
      %1070 = vrot.lane.b32.xlu0 %v1064, 112
      %v1071 = vpop.permute.xlu0 %1070
      %1072 = vrot.lane.b32.xlu0 %v1065, 112
      %v1073 = vpop.permute.xlu0 %1072
      %1074 = vrot.lane.b32.xlu0 %v1066, 112
      %v1075 = vpop.permute.xlu0 %1074
      %v1076 = vsel %vm685, %v1071, %v1073
      %v1077 = vsel %vm685, %v1073, %v1075
      %v1081 = vadd.f32 %v1058, %v1076
      %v1082 = vadd.f32 %v1059, %v1077
      %v1083 = vadd.f32 %v1060, %v1075
      %v1084 = vld [vmem:[#allocation3 + $0x88] sm:$0xff]
      %v1085 = vld [vmem:[#allocation3 + $0x90] sm:$0xff]
      %1088 = vrot.lane.b32.xlu0 %v1084, 111
      %v1089 = vpop.permute.xlu0 %1088
      %1090 = vrot.lane.b32.xlu0 %v1085, 111
      %v1091 = vpop.permute.xlu0 %1090
      %v1092 = vsel %vm594, %v1089, %v1091
      %v1096 = vadd.f32 %v1081, %v1089
      %v1097 = vadd.f32 %v1082, %v1092
      %v1098 = vadd.f32 %v1083, %v1091
      %v1099 = vld [vmem:[#allocation3 + $0xa8] sm:$0xff]
      %v1100 = vld [vmem:[#allocation3 + $0xb0] sm:$0xff]
      %v1101 = vld [vmem:[#allocation3 + $0xb8] sm:$0xff]
      %v1102 = vmul.f32 %v1099, %v713
      %v1103 = vmul.f32 %v1100, %v717
      %v1104 = vmul.f32 %v1101, %v715
      %1108 = vrot.lane.b32.xlu0 %v1102, 110
      %v1109 = vpop.permute.xlu0 %1108
      %1110 = vrot.lane.b32.xlu0 %v1103, 110
      %v1111 = vpop.permute.xlu0 %1110
      %1112 = vrot.lane.b32.xlu0 %v1104, 110
      %v1113 = vpop.permute.xlu0 %1112
      %v1114 = vsel %vm733, %v1109, %v1111
      %v1115 = vsel %vm733, %v1111, %v1113
      %v1119 = vadd.f32 %v1096, %v1109
      %v1120 = vadd.f32 %v1097, %v1114
      %v1121 = vadd.f32 %v1098, %v1115
      %v1122 = vld [vmem:[#allocation3 + $0xc8] sm:$0xff]
      %v1123 = vld [vmem:[#allocation3 + $0xd0] sm:$0xff]
      %v1124 = vld [vmem:[#allocation3 + $0xd8] sm:$0xff]
      %v1125 = vmul.f32 %v1122, %v746
      %v1126 = vmul.f32 %v1123, %v750
      %v1127 = vmul.f32 %v1124, %v748
      %1131 = vrot.lane.b32.xlu0 %v1125, 96
      %v1132 = vpop.permute.xlu0 %1131
      %1133 = vrot.lane.b32.xlu0 %v1126, 96
      %v1134 = vpop.permute.xlu0 %1133
      %1135 = vrot.lane.b32.xlu0 %v1127, 96
      %v1136 = vpop.permute.xlu0 %1135
      %v1137 = vsel %vm766, %v1132, %v1134
      %v1138 = vsel %vm766, %v1134, %v1136
      %v1142 = vadd.f32 %v1119, %v1132
      %v1143 = vadd.f32 %v1120, %v1137
      %v1144 = vadd.f32 %v1121, %v1138
      %v1145 = vld [vmem:[#allocation3 + $0xe8] sm:$0xff]
      %v1146 = vld [vmem:[#allocation3 + $0xf0] sm:$0xff]
      %v1147 = vld [vmem:[#allocation3 + $0xf8] sm:$0xff]
      %1151 = vrot.lane.b32.xlu0 %v1145, 95
      %v1152 = vpop.permute.xlu0 %1151
      %1153 = vrot.lane.b32.xlu0 %v1146, 95
      %v1154 = vpop.permute.xlu0 %1153
      %1155 = vrot.lane.b32.xlu0 %v1147, 95
      %v1156 = vpop.permute.xlu0 %1155
      %v1157 = vsel %vm787, %v1152, %v1154
      %v1158 = vsel %vm787, %v1154, %v1156
      %v1162 = vadd.f32 %v1142, %v1152
      %v1163 = vadd.f32 %v1143, %v1157
      %v1164 = vadd.f32 %v1144, %v1158
      %v1165 = vld [vmem:[#allocation3 + $0x108] sm:$0xff]
      %v1166 = vld [vmem:[#allocation3 + $0x110] sm:$0xff]
      %v1167 = vld [vmem:[#allocation3 + $0x118] sm:$0xff]
      %v1168 = vmul.f32 %v1165, %v800
      %v1169 = vmul.f32 %v1166, %v804
      %v1170 = vmul.f32 %v1167, %v802
      %1174 = vrot.lane.b32.xlu0 %v1168, 94
      %v1175 = vpop.permute.xlu0 %1174
      %1176 = vrot.lane.b32.xlu0 %v1169, 94
      %v1177 = vpop.permute.xlu0 %1176
      %1178 = vrot.lane.b32.xlu0 %v1170, 94
      %v1179 = vpop.permute.xlu0 %1178
      %v1180 = vsel %vm820, %v1175, %v1177
      %v1181 = vsel %vm820, %v1177, %v1179
      %v1185 = vadd.f32 %v1162, %v1175
      %v1186 = vadd.f32 %v1163, %v1180
      %v1187 = vadd.f32 %v1164, %v1181
      %v1188 = vld [vmem:[%s5] sm:$0xff]
      %1190 = vset.pattern.permute.xlu0 0
      %1191 = vperm.xlu0 %1190, %v1188
      %v1192 = vpop.permute.xlu0 %1191
      %v1194 = vadd.f32 %v1185, %v1192
      %v1195 = vadd.f32 %v1186, %v1192
      %v1196 = vadd.f32 %v1187, %v1192
      %vm1197 = vcmp.ge.f32.partialorder %v1194, 0.0
      %vm1198 = vcmp.ge.f32.partialorder %v1195, 0.0
      %vm1199 = vcmp.ge.f32.partialorder %v1196, 0.0
      %v1200 = vmul.f32 %v1194, 0.2
      %v1201 = vmul.f32 %v1195, 0.2
      %v1202 = vmul.f32 %v1196, 0.2
      %v1203 = vsel %vm1197, %v1194, %v1200
      %v1204 = vsel %vm1198, %v1195, %v1201
      %v1205 = vsel %vm1199, %v1196, %v1202
      %1209 = vrot.lane.b32.xlu0 %v1203, 17
      %v1210 = vpop.permute.xlu0 %1209
      %1211 = vrot.lane.b32.xlu0 %v1204, 17
      %v1212 = vpop.permute.xlu0 %1211
      %1213 = vrot.lane.b32.xlu0 %v1205, 17
      %v1214 = vpop.permute.xlu0 %1213
      %v1215 = vsel %vm803, %v1210, %v1212
      %v1216 = vsel %vm803, %v1212, %v1214
      %1219 = vst [vmem:[#allocation2 + $0x20] sm:$0xff] %v1215
      %1220 = vst [vmem:[#allocation2 + $0x28] sm:$0xff] %v1216
      %v1221 = vld [vmem:[#allocation2] sm:$0xff]
      %v1222 = vld [vmem:[#allocation2 + $0x8] sm:$0xff]
      %v1223 = vld [vmem:[#allocation2 + $0x10] sm:$0xff]
      %v1224 = vld [vmem:[#allocation2 + $0x18] sm:$0xff]
      %v1225 = vld [vmem:[#allocation2 + $0x20] sm:$0xff]
      %v1226 = vld [vmem:[#allocation2 + $0x28] sm:$0xff]
      %v1227 = vld [vmem:[%s6] sm:$0xff]
      %v1228 = vld [vmem:[%s6 + $0x8] sm:$0xff]
      %v1229 = vld [vmem:[%s6 + $0x10] sm:$0xff]
      %v1230 = vld [vmem:[%s6 + $0x18] sm:$0xff]
      %v1231 = vld [vmem:[%s6 + $0x20] sm:$0xff]
      %v1232 = vld [vmem:[%s6 + $0x28] sm:$0xff]
      %v1233 = vld [vmem:[%s6 + $0x30] sm:$0xff]
      %v1234 = vld [vmem:[%s6 + $0x38] sm:$0xff]
      %v1235 = vld [vmem:[%s6 + $0x40] sm:$0xff]
      %vm1236 = vcmask 195584
      %v1238 = vsel %vm1236, %v1227, 0
      %v1241 = vsel %vm1236, %v1228, 0
      %v1244 = vsel %vm1236, %v1229, 0
      %v1247 = vsel %vm1236, %v1230, 0
      %v1250 = vsel %vm1236, %v1231, 0
      %v1253 = vsel %vm1236, %v1232, 0
      %v1256 = vsel %vm1236, %v1233, 0
      %v1259 = vsel %vm1236, %v1234, 0
      %v1262 = vsel %vm1236, %v1235, 0
      %1264 = vmatpush.msra.mxu0 0.0
      %1265 = vmatpush.msra.mxu0 0.0
      %1266 = vmatpush.msra.mxu0 0.0
      %1267 = vmatpush.msra.mxu0 0.0
      %1268 = vmatpush.msra.mxu0 0.0
      %1269 = vmatpush.msra.mxu0 0.0
      %1270 = vmatpush.msra.mxu0 0.0
      %1271 = vmatpush.msra.mxu0 0.0
      %1272 = vmatpush.msra.mxu0 0.0
      %1273 = vmatpush.msra.mxu0 0.0
      %1274 = vmatpush.msra.mxu0 0.0
      %1275 = vmatpush.msra.mxu0 0.0
      %1276 = vmatpush.msra.mxu0 0.0
      %1277 = vmatpush.msra.mxu0 %v1225
      %1278 = vmatpush.msra.mxu0 %v1223
      %1279 = vmatpush.msra.mxu0 %v1221
      %1280 = vmatmul.f32.gmra.mxu0 %v1238
      %v1281 = vpop.f32.mrf.mxu0
      %v1282 = vadd.f32 0.0, %v1281
      %1283 = vmatmul.f32.gmra.mxu0 %v1241
      %v1284 = vpop.f32.mrf.mxu0
      %v1285 = vadd.f32 0.0, %v1284
      %1286 = vmatmul.f32.gmra.mxu0 %v1244
      %v1287 = vpop.f32.mrf.mxu0
      %v1288 = vadd.f32 0.0, %v1287
      %1289 = vmatmul.f32.gmra.mxu0 %v1247
      %v1290 = vpop.f32.mrf.mxu0
      %v1291 = vadd.f32 0.0, %v1290
      %1292 = vmatmul.f32.gmra.mxu0 %v1250
      %v1293 = vpop.f32.mrf.mxu0
      %v1294 = vadd.f32 0.0, %v1293
      %1295 = vmatmul.f32.gmra.mxu0 %v1253
      %v1296 = vpop.f32.mrf.mxu0
      %v1297 = vadd.f32 0.0, %v1296
      %1298 = vmatmul.f32.gmra.mxu0 %v1256
      %v1299 = vpop.f32.mrf.mxu0
      %v1300 = vadd.f32 0.0, %v1299
      %1301 = vmatmul.f32.gmra.mxu0 %v1259
      %v1302 = vpop.f32.mrf.mxu0
      %v1303 = vadd.f32 0.0, %v1302
      %1304 = vmatmul.f32.gmra.mxu0 %v1262
      %v1305 = vpop.f32.mrf.mxu0
      %v1306 = vadd.f32 0.0, %v1305
      %1307 = vdwg.mxu0
      %1308 = vmatpush.msra.mxu0 0.0
      %1309 = vmatpush.msra.mxu0 0.0
      %1310 = vmatpush.msra.mxu0 0.0
      %1311 = vmatpush.msra.mxu0 0.0
      %1312 = vmatpush.msra.mxu0 0.0
      %1313 = vmatpush.msra.mxu0 0.0
      %1314 = vmatpush.msra.mxu0 0.0
      %1315 = vmatpush.msra.mxu0 0.0
      %1316 = vmatpush.msra.mxu0 0.0
      %1317 = vmatpush.msra.mxu0 0.0
      %1318 = vmatpush.msra.mxu0 0.0
      %1319 = vmatpush.msra.mxu0 0.0
      %1320 = vmatpush.msra.mxu0 0.0
      %1321 = vmatpush.msra.mxu0 %v1226
      %1322 = vmatpush.msra.mxu0 %v1224
      %1323 = vmatpush.msra.mxu0 %v1222
      %1324 = vmatmul.f32.gmra.mxu0 %v1238
      %v1325 = vpop.f32.mrf.mxu0
      %v1326 = vadd.f32 0.0, %v1325
      %1327 = vmatmul.f32.gmra.mxu0 %v1241
      %v1328 = vpop.f32.mrf.mxu0
      %v1329 = vadd.f32 0.0, %v1328
      %1330 = vmatmul.f32.gmra.mxu0 %v1244
      %v1331 = vpop.f32.mrf.mxu0
      %v1332 = vadd.f32 0.0, %v1331
      %1333 = vmatmul.f32.gmra.mxu0 %v1247
      %v1334 = vpop.f32.mrf.mxu0
      %v1335 = vadd.f32 0.0, %v1334
      %1336 = vmatmul.f32.gmra.mxu0 %v1250
      %v1337 = vpop.f32.mrf.mxu0
      %v1338 = vadd.f32 0.0, %v1337
      %1339 = vmatmul.f32.gmra.mxu0 %v1253
      %v1340 = vpop.f32.mrf.mxu0
      %v1341 = vadd.f32 0.0, %v1340
      %1342 = vmatmul.f32.gmra.mxu0 %v1256
      %v1343 = vpop.f32.mrf.mxu0
      %v1344 = vadd.f32 0.0, %v1343
      %1345 = vmatmul.f32.gmra.mxu0 %v1259
      %v1346 = vpop.f32.mrf.mxu0
      %v1347 = vadd.f32 0.0, %v1346
      %1348 = vmatmul.f32.gmra.mxu0 %v1262
      %v1349 = vpop.f32.mrf.mxu0
      %v1350 = vadd.f32 0.0, %v1349
      %1351 = vdwg.mxu0
      %1352 = vst [vmem:[#allocation3 + $0x8] sm:$0xff] %v1282
      %1353 = vst [vmem:[#allocation3 + $0x10] sm:$0xff] %v1326
      %1354 = vst [vmem:[#allocation3 + $0x28] sm:$0xff] %v1285
      %1355 = vst [vmem:[#allocation3 + $0x30] sm:$0xff] %v1329
      %1356 = vst [vmem:[#allocation3 + $0x48] sm:$0xff] %v1288
      %1357 = vst [vmem:[#allocation3 + $0x50] sm:$0xff] %v1332
      %1358 = vst [vmem:[#allocation3 + $0x68] sm:$0xff] %v1291
      %1359 = vst [vmem:[#allocation3 + $0x70] sm:$0xff] %v1335
      %1360 = vst [vmem:[#allocation3 + $0x88] sm:$0xff] %v1294
      %1361 = vst [vmem:[#allocation3 + $0x90] sm:$0xff] %v1338
      %1362 = vst [vmem:[#allocation3 + $0xa8] sm:$0xff] %v1297
      %1363 = vst [vmem:[#allocation3 + $0xb0] sm:$0xff] %v1341
      %1364 = vst [vmem:[#allocation3 + $0xc8] sm:$0xff] %v1300
      %1365 = vst [vmem:[#allocation3 + $0xd0] sm:$0xff] %v1344
      %1366 = vst [vmem:[#allocation3 + $0xe8] sm:$0xff] %v1303
      %1367 = vst [vmem:[#allocation3 + $0xf0] sm:$0xff] %v1347
      %1368 = vst [vmem:[#allocation3 + $0x108] sm:$0xff] %v1306
      %1369 = vst [vmem:[#allocation3 + $0x110] sm:$0xff] %v1350
      %v1370 = vld [vmem:[#allocation3] sm:$0xff]
      %v1371 = vld [vmem:[#allocation3 + $0x8] sm:$0xff]
      %v1372 = vld [vmem:[#allocation3 + $0x10] sm:$0xff]
      %v1373 = vmul.f32 %v1370, %v591
      %v1374 = vmul.f32 %v1371, %v595
      %v1375 = vmul.f32 %v1372, %v593
      %v1376 = vadd.f32 %v1373, 0.0
      %v1377 = vadd.f32 %v1374, 0.0
      %v1378 = vadd.f32 %v1375, 0.0
      %v1379 = vld [vmem:[#allocation3 + $0x20] sm:$0xff]
      %v1380 = vld [vmem:[#allocation3 + $0x28] sm:$0xff]
      %v1381 = vld [vmem:[#allocation3 + $0x30] sm:$0xff]
      %1385 = vrot.lane.b32.xlu0 %v1379, 127
      %v1386 = vpop.permute.xlu0 %1385
      %1387 = vrot.lane.b32.xlu0 %v1380, 127
      %v1388 = vpop.permute.xlu0 %1387
      %1389 = vrot.lane.b32.xlu0 %v1381, 127
      %v1390 = vpop.permute.xlu0 %1389
      %v1391 = vsel %vm617, %v1386, %v1388
      %v1392 = vsel %vm617, %v1388, %v1390
      %v1396 = vadd.f32 %v1376, %v1391
      %v1397 = vadd.f32 %v1377, %v1392
      %v1398 = vadd.f32 %v1378, %v1390
      %v1399 = vld [vmem:[#allocation3 + $0x40] sm:$0xff]
      %v1400 = vld [vmem:[#allocation3 + $0x48] sm:$0xff]
      %v1401 = vld [vmem:[#allocation3 + $0x50] sm:$0xff]
      %v1402 = vmul.f32 %v1399, %v633
      %v1403 = vmul.f32 %v1400, %v637
      %v1404 = vmul.f32 %v1401, %v635
      %1408 = vrot.lane.b32.xlu0 %v1402, 126
      %v1409 = vpop.permute.xlu0 %1408
      %1410 = vrot.lane.b32.xlu0 %v1403, 126
      %v1411 = vpop.permute.xlu0 %1410
      %1412 = vrot.lane.b32.xlu0 %v1404, 126
      %v1413 = vpop.permute.xlu0 %1412
      %v1414 = vsel %vm653, %v1409, %v1411
      %v1415 = vsel %vm653, %v1411, %v1413
      %v1419 = vadd.f32 %v1396, %v1414
      %v1420 = vadd.f32 %v1397, %v1415
      %v1421 = vadd.f32 %v1398, %v1413
      %v1422 = vld [vmem:[#allocation3 + $0x60] sm:$0xff]
      %v1423 = vld [vmem:[#allocation3 + $0x68] sm:$0xff]
      %v1424 = vld [vmem:[#allocation3 + $0x70] sm:$0xff]
      %v1425 = vmul.f32 %v1422, %v666
      %v1426 = vmul.f32 %v1423, %v669
      %v1427 = vmul.f32 %v1424, %v668
      %1431 = vrot.lane.b32.xlu0 %v1425, 112
      %v1432 = vpop.permute.xlu0 %1431
      %1433 = vrot.lane.b32.xlu0 %v1426, 112
      %v1434 = vpop.permute.xlu0 %1433
      %1435 = vrot.lane.b32.xlu0 %v1427, 112
      %v1436 = vpop.permute.xlu0 %1435
      %v1437 = vsel %vm685, %v1432, %v1434
      %v1438 = vsel %vm685, %v1434, %v1436
      %v1442 = vadd.f32 %v1419, %v1437
      %v1443 = vadd.f32 %v1420, %v1438
      %v1444 = vadd.f32 %v1421, %v1436
      %v1445 = vld [vmem:[#allocation3 + $0x88] sm:$0xff]
      %v1446 = vld [vmem:[#allocation3 + $0x90] sm:$0xff]
      %1449 = vrot.lane.b32.xlu0 %v1445, 111
      %v1450 = vpop.permute.xlu0 %1449
      %1451 = vrot.lane.b32.xlu0 %v1446, 111
      %v1452 = vpop.permute.xlu0 %1451
      %v1453 = vsel %vm594, %v1450, %v1452
      %v1457 = vadd.f32 %v1442, %v1450
      %v1458 = vadd.f32 %v1443, %v1453
      %v1459 = vadd.f32 %v1444, %v1452
      %v1460 = vld [vmem:[#allocation3 + $0xa8] sm:$0xff]
      %v1461 = vld [vmem:[#allocation3 + $0xb0] sm:$0xff]
      %v1462 = vld [vmem:[#allocation3 + $0xb8] sm:$0xff]
      %v1463 = vmul.f32 %v1460, %v713
      %v1464 = vmul.f32 %v1461, %v717
      %v1465 = vmul.f32 %v1462, %v715
      %1469 = vrot.lane.b32.xlu0 %v1463, 110
      %v1470 = vpop.permute.xlu0 %1469
      %1471 = vrot.lane.b32.xlu0 %v1464, 110
      %v1472 = vpop.permute.xlu0 %1471
      %1473 = vrot.lane.b32.xlu0 %v1465, 110
      %v1474 = vpop.permute.xlu0 %1473
      %v1475 = vsel %vm733, %v1470, %v1472
      %v1476 = vsel %vm733, %v1472, %v1474
      %v1480 = vadd.f32 %v1457, %v1470
      %v1481 = vadd.f32 %v1458, %v1475
      %v1482 = vadd.f32 %v1459, %v1476
      %v1483 = vld [vmem:[#allocation3 + $0xc8] sm:$0xff]
      %v1484 = vld [vmem:[#allocation3 + $0xd0] sm:$0xff]
      %v1485 = vld [vmem:[#allocation3 + $0xd8] sm:$0xff]
      %v1486 = vmul.f32 %v1483, %v746
      %v1487 = vmul.f32 %v1484, %v750
      %v1488 = vmul.f32 %v1485, %v748
      %1492 = vrot.lane.b32.xlu0 %v1486, 96
      %v1493 = vpop.permute.xlu0 %1492
      %1494 = vrot.lane.b32.xlu0 %v1487, 96
      %v1495 = vpop.permute.xlu0 %1494
      %1496 = vrot.lane.b32.xlu0 %v1488, 96
      %v1497 = vpop.permute.xlu0 %1496
      %v1498 = vsel %vm766, %v1493, %v1495
      %v1499 = vsel %vm766, %v1495, %v1497
      %v1503 = vadd.f32 %v1480, %v1493
      %v1504 = vadd.f32 %v1481, %v1498
      %v1505 = vadd.f32 %v1482, %v1499
      %v1506 = vld [vmem:[#allocation3 + $0xe8] sm:$0xff]
      %v1507 = vld [vmem:[#allocation3 + $0xf0] sm:$0xff]
      %v1508 = vld [vmem:[#allocation3 + $0xf8] sm:$0xff]
      %1512 = vrot.lane.b32.xlu0 %v1506, 95
      %v1513 = vpop.permute.xlu0 %1512
      %1514 = vrot.lane.b32.xlu0 %v1507, 95
      %v1515 = vpop.permute.xlu0 %1514
      %1516 = vrot.lane.b32.xlu0 %v1508, 95
      %v1517 = vpop.permute.xlu0 %1516
      %v1518 = vsel %vm787, %v1513, %v1515
      %v1519 = vsel %vm787, %v1515, %v1517
      %v1523 = vadd.f32 %v1503, %v1513
      %v1524 = vadd.f32 %v1504, %v1518
      %v1525 = vadd.f32 %v1505, %v1519
      %v1526 = vld [vmem:[#allocation3 + $0x108] sm:$0xff]
      %v1527 = vld [vmem:[#allocation3 + $0x110] sm:$0xff]
      %v1528 = vld [vmem:[#allocation3 + $0x118] sm:$0xff]
      %v1529 = vmul.f32 %v1526, %v800
      %v1530 = vmul.f32 %v1527, %v804
      %v1531 = vmul.f32 %v1528, %v802
      %1535 = vrot.lane.b32.xlu0 %v1529, 94
      %v1536 = vpop.permute.xlu0 %1535
      %1537 = vrot.lane.b32.xlu0 %v1530, 94
      %v1538 = vpop.permute.xlu0 %1537
      %1539 = vrot.lane.b32.xlu0 %v1531, 94
      %v1540 = vpop.permute.xlu0 %1539
      %v1541 = vsel %vm820, %v1536, %v1538
      %v1542 = vsel %vm820, %v1538, %v1540
      %v1546 = vadd.f32 %v1523, %v1536
      %v1547 = vadd.f32 %v1524, %v1541
      %v1548 = vadd.f32 %v1525, %v1542
      %v1549 = vld [vmem:[%s7] sm:$0xff]
      %1551 = vset.pattern.permute.xlu0 0
      %1552 = vperm.xlu0 %1551, %v1549
      %v1553 = vpop.permute.xlu0 %1552
      %v1555 = vadd.f32 %v1546, %v1553
      %v1556 = vadd.f32 %v1547, %v1553
      %v1557 = vadd.f32 %v1548, %v1553
      %vm1558 = vcmp.ge.f32.partialorder %v1555, 0.0
      %vm1559 = vcmp.ge.f32.partialorder %v1556, 0.0
      %vm1560 = vcmp.ge.f32.partialorder %v1557, 0.0
      %v1561 = vmul.f32 %v1555, 0.2
      %v1562 = vmul.f32 %v1556, 0.2
      %v1563 = vmul.f32 %v1557, 0.2
      %v1564 = vsel %vm1558, %v1555, %v1561
      %v1565 = vsel %vm1559, %v1556, %v1562
      %v1566 = vsel %vm1560, %v1557, %v1563
      %1570 = vrot.lane.b32.xlu0 %v1564, 17
      %v1571 = vpop.permute.xlu0 %1570
      %1572 = vrot.lane.b32.xlu0 %v1565, 17
      %v1573 = vpop.permute.xlu0 %1572
      %1574 = vrot.lane.b32.xlu0 %v1566, 17
      %v1575 = vpop.permute.xlu0 %1574
      %v1576 = vsel %vm803, %v1571, %v1573
      %v1577 = vsel %vm803, %v1573, %v1575
      %1580 = vst [vmem:[#allocation2 + $0x30] sm:$0xff] %v1576
      %1581 = vst [vmem:[#allocation2 + $0x38] sm:$0xff] %v1577
      %v1582 = vld [vmem:[#allocation2] sm:$0xff]
      %v1583 = vld [vmem:[#allocation2 + $0x8] sm:$0xff]
      %v1584 = vld [vmem:[#allocation2 + $0x10] sm:$0xff]
      %v1585 = vld [vmem:[#allocation2 + $0x18] sm:$0xff]
      %v1586 = vld [vmem:[#allocation2 + $0x20] sm:$0xff]
      %v1587 = vld [vmem:[#allocation2 + $0x28] sm:$0xff]
      %v1588 = vld [vmem:[#allocation2 + $0x30] sm:$0xff]
      %v1589 = vld [vmem:[#allocation2 + $0x38] sm:$0xff]
      %v1590 = vld [vmem:[%s8] sm:$0xff]
      %v1591 = vld [vmem:[%s8 + $0x8] sm:$0xff]
      %v1592 = vld [vmem:[%s8 + $0x10] sm:$0xff]
      %v1593 = vld [vmem:[%s8 + $0x18] sm:$0xff]
      %v1594 = vld [vmem:[%s8 + $0x20] sm:$0xff]
      %v1595 = vld [vmem:[%s8 + $0x28] sm:$0xff]
      %v1596 = vld [vmem:[%s8 + $0x30] sm:$0xff]
      %v1597 = vld [vmem:[%s8 + $0x38] sm:$0xff]
      %v1598 = vld [vmem:[%s8 + $0x40] sm:$0xff]
      %vm1599 = vcmask 261120
      %v1601 = vsel %vm1599, %v1590, 0
      %v1604 = vsel %vm1599, %v1591, 0
      %v1607 = vsel %vm1599, %v1592, 0
      %v1610 = vsel %vm1599, %v1593, 0
      %v1613 = vsel %vm1599, %v1594, 0
      %v1616 = vsel %vm1599, %v1595, 0
      %v1619 = vsel %vm1599, %v1596, 0
      %v1622 = vsel %vm1599, %v1597, 0
      %v1625 = vsel %vm1599, %v1598, 0
      %1627 = vmatpush.msra.mxu0 0.0
      %1628 = vmatpush.msra.mxu0 0.0
      %1629 = vmatpush.msra.mxu0 0.0
      %1630 = vmatpush.msra.mxu0 0.0
      %1631 = vmatpush.msra.mxu0 0.0
      %1632 = vmatpush.msra.mxu0 0.0
      %1633 = vmatpush.msra.mxu0 0.0
      %1634 = vmatpush.msra.mxu0 0.0
      %1635 = vmatpush.msra.mxu0 0.0
      %1636 = vmatpush.msra.mxu0 0.0
      %1637 = vmatpush.msra.mxu0 0.0
      %1638 = vmatpush.msra.mxu0 0.0
      %1639 = vmatpush.msra.mxu0 %v1588
      %1640 = vmatpush.msra.mxu0 %v1586
      %1641 = vmatpush.msra.mxu0 %v1584
      %1642 = vmatpush.msra.mxu0 %v1582
      %1643 = vmatmul.f32.gmra.mxu0 %v1601
      %v1644 = vpop.f32.mrf.mxu0
      %v1645 = vadd.f32 0.0, %v1644
      %1646 = vmatmul.f32.gmra.mxu0 %v1604
      %v1647 = vpop.f32.mrf.mxu0
      %v1648 = vadd.f32 0.0, %v1647
      %1649 = vmatmul.f32.gmra.mxu0 %v1607
      %v1650 = vpop.f32.mrf.mxu0
      %v1651 = vadd.f32 0.0, %v1650
      %1652 = vmatmul.f32.gmra.mxu0 %v1610
      %v1653 = vpop.f32.mrf.mxu0
      %v1654 = vadd.f32 0.0, %v1653
      %1655 = vmatmul.f32.gmra.mxu0 %v1613
      %v1656 = vpop.f32.mrf.mxu0
      %v1657 = vadd.f32 0.0, %v1656
      %1658 = vmatmul.f32.gmra.mxu0 %v1616
      %v1659 = vpop.f32.mrf.mxu0
      %v1660 = vadd.f32 0.0, %v1659
      %1661 = vmatmul.f32.gmra.mxu0 %v1619
      %v1662 = vpop.f32.mrf.mxu0
      %v1663 = vadd.f32 0.0, %v1662
      %1664 = vmatmul.f32.gmra.mxu0 %v1622
      %v1665 = vpop.f32.mrf.mxu0
      %v1666 = vadd.f32 0.0, %v1665
      %1667 = vmatmul.f32.gmra.mxu0 %v1625
      %v1668 = vpop.f32.mrf.mxu0
      %v1669 = vadd.f32 0.0, %v1668
      %1670 = vdwg.mxu0
      %1671 = vmatpush.msra.mxu0 0.0
      %1672 = vmatpush.msra.mxu0 0.0
      %1673 = vmatpush.msra.mxu0 0.0
      %1674 = vmatpush.msra.mxu0 0.0
      %1675 = vmatpush.msra.mxu0 0.0
      %1676 = vmatpush.msra.mxu0 0.0
      %1677 = vmatpush.msra.mxu0 0.0
      %1678 = vmatpush.msra.mxu0 0.0
      %1679 = vmatpush.msra.mxu0 0.0
      %1680 = vmatpush.msra.mxu0 0.0
      %1681 = vmatpush.msra.mxu0 0.0
      %1682 = vmatpush.msra.mxu0 0.0
      %1683 = vmatpush.msra.mxu0 %v1589
      %1684 = vmatpush.msra.mxu0 %v1587
      %1685 = vmatpush.msra.mxu0 %v1585
      %1686 = vmatpush.msra.mxu0 %v1583
      %1687 = vmatmul.f32.gmra.mxu0 %v1601
      %v1688 = vpop.f32.mrf.mxu0
      %v1689 = vadd.f32 0.0, %v1688
      %1690 = vmatmul.f32.gmra.mxu0 %v1604
      %v1691 = vpop.f32.mrf.mxu0
      %v1692 = vadd.f32 0.0, %v1691
      %1693 = vmatmul.f32.gmra.mxu0 %v1607
      %v1694 = vpop.f32.mrf.mxu0
      %v1695 = vadd.f32 0.0, %v1694
      %1696 = vmatmul.f32.gmra.mxu0 %v1610
      %v1697 = vpop.f32.mrf.mxu0
      %v1698 = vadd.f32 0.0, %v1697
      %1699 = vmatmul.f32.gmra.mxu0 %v1613
      %v1700 = vpop.f32.mrf.mxu0
      %v1701 = vadd.f32 0.0, %v1700
      %1702 = vmatmul.f32.gmra.mxu0 %v1616
      %v1703 = vpop.f32.mrf.mxu0
      %v1704 = vadd.f32 0.0, %v1703
      %1705 = vmatmul.f32.gmra.mxu0 %v1619
      %v1706 = vpop.f32.mrf.mxu0
      %v1707 = vadd.f32 0.0, %v1706
      %1708 = vmatmul.f32.gmra.mxu0 %v1622
      %v1709 = vpop.f32.mrf.mxu0
      %v1710 = vadd.f32 0.0, %v1709
      %1711 = vmatmul.f32.gmra.mxu0 %v1625
      %v1712 = vpop.f32.mrf.mxu0
      %v1713 = vadd.f32 0.0, %v1712
      %1714 = vdwg.mxu0
      %1715 = vst [vmem:[#allocation3 + $0x8] sm:$0xff] %v1645
      %1716 = vst [vmem:[#allocation3 + $0x10] sm:$0xff] %v1689
      %1717 = vst [vmem:[#allocation3 + $0x28] sm:$0xff] %v1648
      %1718 = vst [vmem:[#allocation3 + $0x30] sm:$0xff] %v1692
      %1719 = vst [vmem:[#allocation3 + $0x48] sm:$0xff] %v1651
      %1720 = vst [vmem:[#allocation3 + $0x50] sm:$0xff] %v1695
      %1721 = vst [vmem:[#allocation3 + $0x68] sm:$0xff] %v1654
      %1722 = vst [vmem:[#allocation3 + $0x70] sm:$0xff] %v1698
      %1723 = vst [vmem:[#allocation3 + $0x88] sm:$0xff] %v1657
      %1724 = vst [vmem:[#allocation3 + $0x90] sm:$0xff] %v1701
      %1725 = vst [vmem:[#allocation3 + $0xa8] sm:$0xff] %v1660
      %1726 = vst [vmem:[#allocation3 + $0xb0] sm:$0xff] %v1704
      %1727 = vst [vmem:[#allocation3 + $0xc8] sm:$0xff] %v1663
      %1728 = vst [vmem:[#allocation3 + $0xd0] sm:$0xff] %v1707
      %1729 = vst [vmem:[#allocation3 + $0xe8] sm:$0xff] %v1666
      %1730 = vst [vmem:[#allocation3 + $0xf0] sm:$0xff] %v1710
      %1731 = vst [vmem:[#allocation3 + $0x108] sm:$0xff] %v1669
      %1732 = vst [vmem:[#allocation3 + $0x110] sm:$0xff] %v1713
      %v1733 = vld [vmem:[#allocation3] sm:$0xff]
      %v1734 = vld [vmem:[#allocation3 + $0x8] sm:$0xff]
      %v1735 = vld [vmem:[#allocation3 + $0x10] sm:$0xff]
      %v1736 = vmul.f32 %v1733, %v591
      %v1737 = vmul.f32 %v1734, %v595
      %v1738 = vmul.f32 %v1735, %v593
      %v1739 = vadd.f32 %v1736, 0.0
      %v1740 = vadd.f32 %v1737, 0.0
      %v1741 = vadd.f32 %v1738, 0.0
      %v1742 = vld [vmem:[#allocation3 + $0x20] sm:$0xff]
      %v1743 = vld [vmem:[#allocation3 + $0x28] sm:$0xff]
      %v1744 = vld [vmem:[#allocation3 + $0x30] sm:$0xff]
      %1748 = vrot.lane.b32.xlu0 %v1742, 127
      %v1749 = vpop.permute.xlu0 %1748
      %1750 = vrot.lane.b32.xlu0 %v1743, 127
      %v1751 = vpop.permute.xlu0 %1750
      %1752 = vrot.lane.b32.xlu0 %v1744, 127
      %v1753 = vpop.permute.xlu0 %1752
      %v1754 = vsel %vm617, %v1749, %v1751
      %v1755 = vsel %vm617, %v1751, %v1753
      %v1759 = vadd.f32 %v1739, %v1754
      %v1760 = vadd.f32 %v1740, %v1755
      %v1761 = vadd.f32 %v1741, %v1753
      %v1762 = vld [vmem:[#allocation3 + $0x40] sm:$0xff]
      %v1763 = vld [vmem:[#allocation3 + $0x48] sm:$0xff]
      %v1764 = vld [vmem:[#allocation3 + $0x50] sm:$0xff]
      %v1765 = vmul.f32 %v1762, %v633
      %v1766 = vmul.f32 %v1763, %v637
      %v1767 = vmul.f32 %v1764, %v635
      %1771 = vrot.lane.b32.xlu0 %v1765, 126
      %v1772 = vpop.permute.xlu0 %1771
      %1773 = vrot.lane.b32.xlu0 %v1766, 126
      %v1774 = vpop.permute.xlu0 %1773
      %1775 = vrot.lane.b32.xlu0 %v1767, 126
      %v1776 = vpop.permute.xlu0 %1775
      %v1777 = vsel %vm653, %v1772, %v1774
      %v1778 = vsel %vm653, %v1774, %v1776
      %v1782 = vadd.f32 %v1759, %v1777
      %v1783 = vadd.f32 %v1760, %v1778
      %v1784 = vadd.f32 %v1761, %v1776
      %v1785 = vld [vmem:[#allocation3 + $0x60] sm:$0xff]
      %v1786 = vld [vmem:[#allocation3 + $0x68] sm:$0xff]
      %v1787 = vld [vmem:[#allocation3 + $0x70] sm:$0xff]
      %v1788 = vmul.f32 %v1785, %v666
      %v1789 = vmul.f32 %v1786, %v669
      %v1790 = vmul.f32 %v1787, %v668
      %1794 = vrot.lane.b32.xlu0 %v1788, 112
      %v1795 = vpop.permute.xlu0 %1794
      %1796 = vrot.lane.b32.xlu0 %v1789, 112
      %v1797 = vpop.permute.xlu0 %1796
      %1798 = vrot.lane.b32.xlu0 %v1790, 112
      %v1799 = vpop.permute.xlu0 %1798
      %v1800 = vsel %vm685, %v1795, %v1797
      %v1801 = vsel %vm685, %v1797, %v1799
      %v1805 = vadd.f32 %v1782, %v1800
      %v1806 = vadd.f32 %v1783, %v1801
      %v1807 = vadd.f32 %v1784, %v1799
      %v1808 = vld [vmem:[#allocation3 + $0x88] sm:$0xff]
      %v1809 = vld [vmem:[#allocation3 + $0x90] sm:$0xff]
      %1812 = vrot.lane.b32.xlu0 %v1808, 111
      %v1813 = vpop.permute.xlu0 %1812
      %1814 = vrot.lane.b32.xlu0 %v1809, 111
      %v1815 = vpop.permute.xlu0 %1814
      %v1816 = vsel %vm594, %v1813, %v1815
      %v1820 = vadd.f32 %v1805, %v1813
      %v1821 = vadd.f32 %v1806, %v1816
      %v1822 = vadd.f32 %v1807, %v1815
      %v1823 = vld [vmem:[#allocation3 + $0xa8] sm:$0xff]
      %v1824 = vld [vmem:[#allocation3 + $0xb0] sm:$0xff]
      %v1825 = vld [vmem:[#allocation3 + $0xb8] sm:$0xff]
      %v1826 = vmul.f32 %v1823, %v713
      %v1827 = vmul.f32 %v1824, %v717
      %v1828 = vmul.f32 %v1825, %v715
      %1832 = vrot.lane.b32.xlu0 %v1826, 110
      %v1833 = vpop.permute.xlu0 %1832
      %1834 = vrot.lane.b32.xlu0 %v1827, 110
      %v1835 = vpop.permute.xlu0 %1834
      %1836 = vrot.lane.b32.xlu0 %v1828, 110
      %v1837 = vpop.permute.xlu0 %1836
      %v1838 = vsel %vm733, %v1833, %v1835
      %v1839 = vsel %vm733, %v1835, %v1837
      %v1843 = vadd.f32 %v1820, %v1833
      %v1844 = vadd.f32 %v1821, %v1838
      %v1845 = vadd.f32 %v1822, %v1839
      %v1846 = vld [vmem:[#allocation3 + $0xc8] sm:$0xff]
      %v1847 = vld [vmem:[#allocation3 + $0xd0] sm:$0xff]
      %v1848 = vld [vmem:[#allocation3 + $0xd8] sm:$0xff]
      %v1849 = vmul.f32 %v1846, %v746
      %v1850 = vmul.f32 %v1847, %v750
      %v1851 = vmul.f32 %v1848, %v748
      %1855 = vrot.lane.b32.xlu0 %v1849, 96
      %v1856 = vpop.permute.xlu0 %1855
      %1857 = vrot.lane.b32.xlu0 %v1850, 96
      %v1858 = vpop.permute.xlu0 %1857
      %1859 = vrot.lane.b32.xlu0 %v1851, 96
      %v1860 = vpop.permute.xlu0 %1859
      %v1861 = vsel %vm766, %v1856, %v1858
      %v1862 = vsel %vm766, %v1858, %v1860
      %v1866 = vadd.f32 %v1843, %v1856
      %v1867 = vadd.f32 %v1844, %v1861
      %v1868 = vadd.f32 %v1845, %v1862
      %v1869 = vld [vmem:[#allocation3 + $0xe8] sm:$0xff]
      %v1870 = vld [vmem:[#allocation3 + $0xf0] sm:$0xff]
      %v1871 = vld [vmem:[#allocation3 + $0xf8] sm:$0xff]
      %1875 = vrot.lane.b32.xlu0 %v1869, 95
      %v1876 = vpop.permute.xlu0 %1875
      %1877 = vrot.lane.b32.xlu0 %v1870, 95
      %v1878 = vpop.permute.xlu0 %1877
      %1879 = vrot.lane.b32.xlu0 %v1871, 95
      %v1880 = vpop.permute.xlu0 %1879
      %v1881 = vsel %vm787, %v1876, %v1878
      %v1882 = vsel %vm787, %v1878, %v1880
      %v1886 = vadd.f32 %v1866, %v1876
      %v1887 = vadd.f32 %v1867, %v1881
      %v1888 = vadd.f32 %v1868, %v1882
      %v1889 = vld [vmem:[#allocation3 + $0x108] sm:$0xff]
      %v1890 = vld [vmem:[#allocation3 + $0x110] sm:$0xff]
      %v1891 = vld [vmem:[#allocation3 + $0x118] sm:$0xff]
      %v1892 = vmul.f32 %v1889, %v800
      %v1893 = vmul.f32 %v1890, %v804
      %v1894 = vmul.f32 %v1891, %v802
      %1898 = vrot.lane.b32.xlu0 %v1892, 94
      %v1899 = vpop.permute.xlu0 %1898
      %1900 = vrot.lane.b32.xlu0 %v1893, 94
      %v1901 = vpop.permute.xlu0 %1900
      %1902 = vrot.lane.b32.xlu0 %v1894, 94
      %v1903 = vpop.permute.xlu0 %1902
      %v1904 = vsel %vm820, %v1899, %v1901
      %v1905 = vsel %vm820, %v1901, %v1903
      %v1909 = vadd.f32 %v1886, %v1899
      %v1910 = vadd.f32 %v1887, %v1904
      %v1911 = vadd.f32 %v1888, %v1905
      %v1912 = vld [vmem:[%s9] sm:$0xff]
      %1914 = vset.pattern.permute.xlu0 0
      %1915 = vperm.xlu0 %1914, %v1912
      %v1916 = vpop.permute.xlu0 %1915
      %v1918 = vadd.f32 %v1909, %v1916
      %v1919 = vadd.f32 %v1910, %v1916
      %v1920 = vadd.f32 %v1911, %v1916
      %vm1921 = vcmp.ge.f32.partialorder %v1918, 0.0
      %vm1922 = vcmp.ge.f32.partialorder %v1919, 0.0
      %vm1923 = vcmp.ge.f32.partialorder %v1920, 0.0
      %v1924 = vmul.f32 %v1918, 0.2
      %v1925 = vmul.f32 %v1919, 0.2
      %v1926 = vmul.f32 %v1920, 0.2
      %v1927 = vsel %vm1921, %v1918, %v1924
      %v1928 = vsel %vm1922, %v1919, %v1925
      %v1929 = vsel %vm1923, %v1920, %v1926
      %1933 = vrot.lane.b32.xlu0 %v1927, 17
      %v1934 = vpop.permute.xlu0 %1933
      %1935 = vrot.lane.b32.xlu0 %v1928, 17
      %v1936 = vpop.permute.xlu0 %1935
      %1937 = vrot.lane.b32.xlu0 %v1929, 17
      %v1938 = vpop.permute.xlu0 %1937
      %v1939 = vsel %vm803, %v1934, %v1936
      %v1940 = vsel %vm803, %v1936, %v1938
      %1943 = vst [vmem:[#allocation2 + $0x40] sm:$0xff] %v1939
      %1944 = vst [vmem:[#allocation2 + $0x48] sm:$0xff] %v1940
      %v1945 = vld [vmem:[#allocation2] sm:$0xff]
      %v1946 = vld [vmem:[#allocation2 + $0x8] sm:$0xff]
      %v1947 = vld [vmem:[#allocation2 + $0x10] sm:$0xff]
      %v1948 = vld [vmem:[#allocation2 + $0x18] sm:$0xff]
      %v1949 = vld [vmem:[#allocation2 + $0x20] sm:$0xff]
      %v1950 = vld [vmem:[#allocation2 + $0x28] sm:$0xff]
      %v1951 = vld [vmem:[#allocation2 + $0x30] sm:$0xff]
      %v1952 = vld [vmem:[#allocation2 + $0x38] sm:$0xff]
      %v1953 = vld [vmem:[#allocation2 + $0x40] sm:$0xff]
      %v1954 = vld [vmem:[#allocation2 + $0x48] sm:$0xff]
      %v1955 = vld [vmem:[%s10] sm:$0xff]
      %v1956 = vld [vmem:[%s10 + $0x8] sm:$0xff]
      %v1957 = vld [vmem:[%s10 + $0x10] sm:$0xff]
      %v1958 = vld [vmem:[%s10 + $0x18] sm:$0xff]
      %v1959 = vld [vmem:[%s10 + $0x20] sm:$0xff]
      %v1960 = vld [vmem:[%s10 + $0x28] sm:$0xff]
      %v1961 = vld [vmem:[%s10 + $0x30] sm:$0xff]
      %v1962 = vld [vmem:[%s10 + $0x38] sm:$0xff]
      %v1963 = vld [vmem:[%s10 + $0x40] sm:$0xff]
      %vm1964 = vcmask 326656
      %v1966 = vsel %vm1964, %v1955, 0
      %v1969 = vsel %vm1964, %v1956, 0
      %v1972 = vsel %vm1964, %v1957, 0
      %v1975 = vsel %vm1964, %v1958, 0
      %v1978 = vsel %vm1964, %v1959, 0
      %v1981 = vsel %vm1964, %v1960, 0
      %v1984 = vsel %vm1964, %v1961, 0
      %v1987 = vsel %vm1964, %v1962, 0
      %v1990 = vsel %vm1964, %v1963, 0
      %1992 = vmatpush.msra.mxu0 0.0
      %1993 = vmatpush.msra.mxu0 0.0
      %1994 = vmatpush.msra.mxu0 0.0
      %1995 = vmatpush.msra.mxu0 0.0
      %1996 = vmatpush.msra.mxu0 0.0
      %1997 = vmatpush.msra.mxu0 0.0
      %1998 = vmatpush.msra.mxu0 0.0
      %1999 = vmatpush.msra.mxu0 0.0
      %2000 = vmatpush.msra.mxu0 0.0
      %2001 = vmatpush.msra.mxu0 0.0
      %2002 = vmatpush.msra.mxu0 0.0
      %2003 = vmatpush.msra.mxu0 %v1953
      %2004 = vmatpush.msra.mxu0 %v1951
      %2005 = vmatpush.msra.mxu0 %v1949
      %2006 = vmatpush.msra.mxu0 %v1947
      %2007 = vmatpush.msra.mxu0 %v1945
      %2008 = vmatmul.f32.gmra.mxu0 %v1966
      %v2009 = vpop.f32.mrf.mxu0
      %v2010 = vadd.f32 0.0, %v2009
      %2011 = vmatmul.f32.gmra.mxu0 %v1969
      %v2012 = vpop.f32.mrf.mxu0
      %v2013 = vadd.f32 0.0, %v2012
      %2014 = vmatmul.f32.gmra.mxu0 %v1972
      %v2015 = vpop.f32.mrf.mxu0
      %v2016 = vadd.f32 0.0, %v2015
      %2017 = vmatmul.f32.gmra.mxu0 %v1975
      %v2018 = vpop.f32.mrf.mxu0
      %v2019 = vadd.f32 0.0, %v2018
      %2020 = vmatmul.f32.gmra.mxu0 %v1978
      %v2021 = vpop.f32.mrf.mxu0
      %v2022 = vadd.f32 0.0, %v2021
      %2023 = vmatmul.f32.gmra.mxu0 %v1981
      %v2024 = vpop.f32.mrf.mxu0
      %v2025 = vadd.f32 0.0, %v2024
      %2026 = vmatmul.f32.gmra.mxu0 %v1984
      %v2027 = vpop.f32.mrf.mxu0
      %v2028 = vadd.f32 0.0, %v2027
      %2029 = vmatmul.f32.gmra.mxu0 %v1987
      %v2030 = vpop.f32.mrf.mxu0
      %v2031 = vadd.f32 0.0, %v2030
      %2032 = vmatmul.f32.gmra.mxu0 %v1990
      %v2033 = vpop.f32.mrf.mxu0
      %v2034 = vadd.f32 0.0, %v2033
      %2035 = vdwg.mxu0
      %2036 = vmatpush.msra.mxu0 0.0
      %2037 = vmatpush.msra.mxu0 0.0
      %2038 = vmatpush.msra.mxu0 0.0
      %2039 = vmatpush.msra.mxu0 0.0
      %2040 = vmatpush.msra.mxu0 0.0
      %2041 = vmatpush.msra.mxu0 0.0
      %2042 = vmatpush.msra.mxu0 0.0
      %2043 = vmatpush.msra.mxu0 0.0
      %2044 = vmatpush.msra.mxu0 0.0
      %2045 = vmatpush.msra.mxu0 0.0
      %2046 = vmatpush.msra.mxu0 0.0
      %2047 = vmatpush.msra.mxu0 %v1954
      %2048 = vmatpush.msra.mxu0 %v1952
      %2049 = vmatpush.msra.mxu0 %v1950
      %2050 = vmatpush.msra.mxu0 %v1948
      %2051 = vmatpush.msra.mxu0 %v1946
      %2052 = vmatmul.f32.gmra.mxu0 %v1966
      %v2053 = vpop.f32.mrf.mxu0
      %v2054 = vadd.f32 0.0, %v2053
      %2055 = vmatmul.f32.gmra.mxu0 %v1969
      %v2056 = vpop.f32.mrf.mxu0
      %v2057 = vadd.f32 0.0, %v2056
      %2058 = vmatmul.f32.gmra.mxu0 %v1972
      %v2059 = vpop.f32.mrf.mxu0
      %v2060 = vadd.f32 0.0, %v2059
      %2061 = vmatmul.f32.gmra.mxu0 %v1975
      %v2062 = vpop.f32.mrf.mxu0
      %v2063 = vadd.f32 0.0, %v2062
      %2064 = vmatmul.f32.gmra.mxu0 %v1978
      %v2065 = vpop.f32.mrf.mxu0
      %v2066 = vadd.f32 0.0, %v2065
      %2067 = vmatmul.f32.gmra.mxu0 %v1981
      %v2068 = vpop.f32.mrf.mxu0
      %v2069 = vadd.f32 0.0, %v2068
      %2070 = vmatmul.f32.gmra.mxu0 %v1984
      %v2071 = vpop.f32.mrf.mxu0
      %v2072 = vadd.f32 0.0, %v2071
      %2073 = vmatmul.f32.gmra.mxu0 %v1987
      %v2074 = vpop.f32.mrf.mxu0
      %v2075 = vadd.f32 0.0, %v2074
      %2076 = vmatmul.f32.gmra.mxu0 %v1990
      %v2077 = vpop.f32.mrf.mxu0
      %v2078 = vadd.f32 0.0, %v2077
      %2079 = vdwg.mxu0
      %2080 = vst [vmem:[#allocation3 + $0x8] sm:$0xff] %v2010
      %2081 = vst [vmem:[#allocation3 + $0x10] sm:$0xff] %v2054
      %2082 = vst [vmem:[#allocation3 + $0x28] sm:$0xff] %v2013
      %2083 = vst [vmem:[#allocation3 + $0x30] sm:$0xff] %v2057
      %2084 = vst [vmem:[#allocation3 + $0x48] sm:$0xff] %v2016
      %2085 = vst [vmem:[#allocation3 + $0x50] sm:$0xff] %v2060
      %2086 = vst [vmem:[#allocation3 + $0x68] sm:$0xff] %v2019
      %2087 = vst [vmem:[#allocation3 + $0x70] sm:$0xff] %v2063
      %2088 = vst [vmem:[#allocation3 + $0x88] sm:$0xff] %v2022
      %2089 = vst [vmem:[#allocation3 + $0x90] sm:$0xff] %v2066
      %2090 = vst [vmem:[#allocation3 + $0xa8] sm:$0xff] %v2025
      %2091 = vst [vmem:[#allocation3 + $0xb0] sm:$0xff] %v2069
      %2092 = vst [vmem:[#allocation3 + $0xc8] sm:$0xff] %v2028
      %2093 = vst [vmem:[#allocation3 + $0xd0] sm:$0xff] %v2072
      %2094 = vst [vmem:[#allocation3 + $0xe8] sm:$0xff] %v2031
      %2095 = vst [vmem:[#allocation3 + $0xf0] sm:$0xff] %v2075
      %2096 = vst [vmem:[#allocation3 + $0x108] sm:$0xff] %v2034
      %2097 = vst [vmem:[#allocation3 + $0x110] sm:$0xff] %v2078
      %v2098 = vld [vmem:[#allocation3] sm:$0xff]
      %v2099 = vld [vmem:[#allocation3 + $0x8] sm:$0xff]
      %v2100 = vld [vmem:[#allocation3 + $0x10] sm:$0xff]
      %v2101 = vmul.f32 %v2098, %v591
      %v2102 = vmul.f32 %v2099, %v595
      %v2103 = vmul.f32 %v2100, %v593
      %v2104 = vadd.f32 %v2101, 0.0
      %v2105 = vadd.f32 %v2102, 0.0
      %v2106 = vadd.f32 %v2103, 0.0
      %v2107 = vld [vmem:[#allocation3 + $0x20] sm:$0xff]
      %v2108 = vld [vmem:[#allocation3 + $0x28] sm:$0xff]
      %v2109 = vld [vmem:[#allocation3 + $0x30] sm:$0xff]
      %2113 = vrot.lane.b32.xlu0 %v2107, 127
      %v2114 = vpop.permute.xlu0 %2113
      %2115 = vrot.lane.b32.xlu0 %v2108, 127
      %v2116 = vpop.permute.xlu0 %2115
      %2117 = vrot.lane.b32.xlu0 %v2109, 127
      %v2118 = vpop.permute.xlu0 %2117
      %v2119 = vsel %vm617, %v2114, %v2116
      %v2120 = vsel %vm617, %v2116, %v2118
      %v2124 = vadd.f32 %v2104, %v2119
      %v2125 = vadd.f32 %v2105, %v2120
      %v2126 = vadd.f32 %v2106, %v2118
      %v2127 = vld [vmem:[#allocation3 + $0x40] sm:$0xff]
      %v2128 = vld [vmem:[#allocation3 + $0x48] sm:$0xff]
      %v2129 = vld [vmem:[#allocation3 + $0x50] sm:$0xff]
      %v2130 = vmul.f32 %v2127, %v633
      %v2131 = vmul.f32 %v2128, %v637
      %v2132 = vmul.f32 %v2129, %v635
      %2136 = vrot.lane.b32.xlu0 %v2130, 126
      %v2137 = vpop.permute.xlu0 %2136
      %2138 = vrot.lane.b32.xlu0 %v2131, 126
      %v2139 = vpop.permute.xlu0 %2138
      %2140 = vrot.lane.b32.xlu0 %v2132, 126
      %v2141 = vpop.permute.xlu0 %2140
      %v2142 = vsel %vm653, %v2137, %v2139
      %v2143 = vsel %vm653, %v2139, %v2141
      %v2147 = vadd.f32 %v2124, %v2142
      %v2148 = vadd.f32 %v2125, %v2143
      %v2149 = vadd.f32 %v2126, %v2141
      %v2150 = vld [vmem:[#allocation3 + $0x60] sm:$0xff]
      %v2151 = vld [vmem:[#allocation3 + $0x68] sm:$0xff]
      %v2152 = vld [vmem:[#allocation3 + $0x70] sm:$0xff]
      %v2153 = vmul.f32 %v2150, %v666
      %v2154 = vmul.f32 %v2151, %v669
      %v2155 = vmul.f32 %v2152, %v668
      %2159 = vrot.lane.b32.xlu0 %v2153, 112
      %v2160 = vpop.permute.xlu0 %2159
      %2161 = vrot.lane.b32.xlu0 %v2154, 112
      %v2162 = vpop.permute.xlu0 %2161
      %2163 = vrot.lane.b32.xlu0 %v2155, 112
      %v2164 = vpop.permute.xlu0 %2163
      %v2165 = vsel %vm685, %v2160, %v2162
      %v2166 = vsel %vm685, %v2162, %v2164
      %v2170 = vadd.f32 %v2147, %v2165
      %v2171 = vadd.f32 %v2148, %v2166
      %v2172 = vadd.f32 %v2149, %v2164
      %v2173 = vld [vmem:[#allocation3 + $0x88] sm:$0xff]
      %v2174 = vld [vmem:[#allocation3 + $0x90] sm:$0xff]
      %2177 = vrot.lane.b32.xlu0 %v2173, 111
      %v2178 = vpop.permute.xlu0 %2177
      %2179 = vrot.lane.b32.xlu0 %v2174, 111
      %v2180 = vpop.permute.xlu0 %2179
      %v2181 = vsel %vm594, %v2178, %v2180
      %v2185 = vadd.f32 %v2170, %v2178
      %v2186 = vadd.f32 %v2171, %v2181
      %v2187 = vadd.f32 %v2172, %v2180
      %v2188 = vld [vmem:[#allocation3 + $0xa8] sm:$0xff]
      %v2189 = vld [vmem:[#allocation3 + $0xb0] sm:$0xff]
      %v2190 = vld [vmem:[#allocation3 + $0xb8] sm:$0xff]
      %v2191 = vmul.f32 %v2188, %v713
      %v2192 = vmul.f32 %v2189, %v717
      %v2193 = vmul.f32 %v2190, %v715
      %2197 = vrot.lane.b32.xlu0 %v2191, 110
      %v2198 = vpop.permute.xlu0 %2197
      %2199 = vrot.lane.b32.xlu0 %v2192, 110
      %v2200 = vpop.permute.xlu0 %2199
      %2201 = vrot.lane.b32.xlu0 %v2193, 110
      %v2202 = vpop.permute.xlu0 %2201
      %v2203 = vsel %vm733, %v2198, %v2200
      %v2204 = vsel %vm733, %v2200, %v2202
      %v2208 = vadd.f32 %v2185, %v2198
      %v2209 = vadd.f32 %v2186, %v2203
      %v2210 = vadd.f32 %v2187, %v2204
      %v2211 = vld [vmem:[#allocation3 + $0xc8] sm:$0xff]
      %v2212 = vld [vmem:[#allocation3 + $0xd0] sm:$0xff]
      %v2213 = vld [vmem:[#allocation3 + $0xd8] sm:$0xff]
      %v2214 = vmul.f32 %v2211, %v746
      %v2215 = vmul.f32 %v2212, %v750
      %v2216 = vmul.f32 %v2213, %v748
      %2220 = vrot.lane.b32.xlu0 %v2214, 96
      %v2221 = vpop.permute.xlu0 %2220
      %2222 = vrot.lane.b32.xlu0 %v2215, 96
      %v2223 = vpop.permute.xlu0 %2222
      %2224 = vrot.lane.b32.xlu0 %v2216, 96
      %v2225 = vpop.permute.xlu0 %2224
      %v2226 = vsel %vm766, %v2221, %v2223
      %v2227 = vsel %vm766, %v2223, %v2225
      %v2231 = vadd.f32 %v2208, %v2221
      %v2232 = vadd.f32 %v2209, %v2226
      %v2233 = vadd.f32 %v2210, %v2227
      %v2234 = vld [vmem:[#allocation3 + $0xe8] sm:$0xff]
      %v2235 = vld [vmem:[#allocation3 + $0xf0] sm:$0xff]
      %v2236 = vld [vmem:[#allocation3 + $0xf8] sm:$0xff]
      %2240 = vrot.lane.b32.xlu0 %v2234, 95
      %v2241 = vpop.permute.xlu0 %2240
      %2242 = vrot.lane.b32.xlu0 %v2235, 95
      %v2243 = vpop.permute.xlu0 %2242
      %2244 = vrot.lane.b32.xlu0 %v2236, 95
      %v2245 = vpop.permute.xlu0 %2244
      %v2246 = vsel %vm787, %v2241, %v2243
      %v2247 = vsel %vm787, %v2243, %v2245
      %v2251 = vadd.f32 %v2231, %v2241
      %v2252 = vadd.f32 %v2232, %v2246
      %v2253 = vadd.f32 %v2233, %v2247
      %v2254 = vld [vmem:[#allocation3 + $0x108] sm:$0xff]
      %v2255 = vld [vmem:[#allocation3 + $0x110] sm:$0xff]
      %v2256 = vld [vmem:[#allocation3 + $0x118] sm:$0xff]
      %v2257 = vmul.f32 %v2254, %v800
      %v2258 = vmul.f32 %v2255, %v804
      %v2259 = vmul.f32 %v2256, %v802
      %2263 = vrot.lane.b32.xlu0 %v2257, 94
      %v2264 = vpop.permute.xlu0 %2263
      %2265 = vrot.lane.b32.xlu0 %v2258, 94
      %v2266 = vpop.permute.xlu0 %2265
      %2267 = vrot.lane.b32.xlu0 %v2259, 94
      %v2268 = vpop.permute.xlu0 %2267
      %v2269 = vsel %vm820, %v2264, %v2266
      %v2270 = vsel %vm820, %v2266, %v2268
      %v2274 = vadd.f32 %v2251, %v2264
      %v2275 = vadd.f32 %v2252, %v2269
      %v2276 = vadd.f32 %v2253, %v2270
      %v2277 = vld [vmem:[%s11] sm:$0xff]
      %2279 = vset.pattern.permute.xlu0 0
      %2280 = vperm.xlu0 %2279, %v2277
      %v2281 = vpop.permute.xlu0 %2280
      %v2283 = vadd.f32 %v2274, %v2281
      %v2284 = vadd.f32 %v2275, %v2281
      %v2285 = vadd.f32 %v2276, %v2281
      %v2286 = vmul.f32 %v2283, 0.2
      %v2287 = vmul.f32 %v2284, 0.2
      %v2288 = vmul.f32 %v2285, 0.2
      %v2289 = vld [vmem:[%s408] sm:$0xff]
      %v2290 = vld [vmem:[%s408 + $0x8] sm:$0xff]
      %2293 = vrot.lane.b32.xlu0 %v2289, 111
      %v2294 = vpop.permute.xlu0 %2293
      %2295 = vrot.lane.b32.xlu0 %v2290, 111
      %v2296 = vpop.permute.xlu0 %2295
      %v2297 = vsel %vm594, %v2294, %v2296
      %v2301 = vadd.f32 %v2286, %v2294
      %v2302 = vadd.f32 %v2287, %v2297
      %v2303 = vadd.f32 %v2288, %v2296
      %2307 = vrot.lane.b32.xlu0 %v2301, 17
      %v2308 = vpop.permute.xlu0 %2307
      %2309 = vrot.lane.b32.xlu0 %v2302, 17
      %v2310 = vpop.permute.xlu0 %2309
      %2311 = vrot.lane.b32.xlu0 %v2303, 17
      %v2312 = vpop.permute.xlu0 %2311
      %v2313 = vsel %vm803, %v2308, %v2310
      %v2314 = vsel %vm803, %v2310, %v2312
      %2317 = vst [vmem:[%s413] sm:$0xff] %v2313
      %2318 = vst [vmem:[%s413 + $0x8] sm:$0xff] %v2314
      %p2319 = scmp.lt.s32.totalorder %s23, 1
      %s2320 = scalar_select %p2319, %s23, 1
      %s2321 = smul.addr %s2320, 2
      %s2322 = smul.addr %s2321, 8
      %s2323 = scalar_lea.vmem %s12, %s2322
      // Predicated region
      $region69: #{residual_dense_block.1} parent=67 // pred_check
        %p2324 = pneg %p298
      $region70: #{residual_dense_block.1} parent=67 // pred_check_branch
        %2326 = sbr.rel (%p2324) target = $region72
      $region71: #{residual_dense_block.1} parent=67 // pred_region
        _
      $region72: #{residual_dense_block.1} parent=67 // pred_fallthru
        _
    $region68: #{residual_dense_block.1} parent=5 // pred_fallthru
      _
    %p2327 = scmp.le.s32.totalorder 2, %s18
    // Predicated region
    $region73: #{residual_dense_block.1} parent=5 // pred_check
      %p2328 = pneg %p2327
    $region74: #{residual_dense_block.1} parent=5 // pred_check_branch
      %2330 = sbr.rel (%p2328) target = $region76
    $region75: #{residual_dense_block.1} parent=5 // pred_region
      %s2331 = ssub.s32 %s18, 2
      // Predicated region
      $region77: #{residual_dense_block.1} parent=75 // pred_check
        %p2332 = pneg %p304
      $region78: #{residual_dense_block.1} parent=75 // pred_check_branch
        %2334 = sbr.rel (%p2332) target = $region80
      $region79: #{residual_dense_block.1} parent=75 // pred_region
        %p2335 = scmp.lt.s32.totalorder %s24, 1
        %s2336 = scalar_select %p2335, %s24, 1
        %s2337 = smul.addr %s2336, 2
        %s2338 = smul.addr %s2337, 8
        %s2339 = scalar_lea.vmem %s12, %s2338
      $region80: #{residual_dense_block.1} parent=75 // pred_fallthru
        _
    $region76: #{residual_dense_block.1} parent=5 // pred_fallthru
      _
  $region6: #{residual_dense_block.1} parent=0 // loop_footer
    %s22 = sadd.s32 1, %s18
  $region7: #{residual_dense_block.1} parent=0 // loop_footer_branch
    %17 = sbr.rel target = $region3
  $region8: #{residual_dense_block.1} parent=0 // loop_exit
    _

</llo_original>
